<compile_context>
chip_gen: v7x
topology: tpu7x:2x2x1
jax: 0.10.0
libtpu: 0.0.40
codegen_flags: <defaults>
</compile_context>

<pallas_src>
import math

import jax
import jax.numpy as jnp
from jax import lax
from jax.experimental import pallas as pl
from jax.experimental.pallas import tpu as pltpu


_NEG_INF = -1e30  # large finite negative instead of -inf (avoids NaN on fully-masked rows)


def _pick_heads_per_block(num_heads, head_dim):
    # 2-4 heads per step restores MXU width on the projections without blowing up the
    # per-step (hb, block_q, sk) attention block.
    for hb in (4, 2, 1):
        if num_heads % hb == 0 and hb * head_dim <= 512:
            return hb
    return 1


def _pick_block_q(sq, target=256):
    # q tile: multiple of 32 (valid sublane tiling for bf16/int8 blocks) or the full length.
    if sq <= target:
        return sq
    tq = target
    while tq >= 32:
        if sq % tq == 0:
            return tq
        tq //= 2
    return sq


def _vmem_cap_bytes():
    try:
        cap = getattr(pltpu.get_tpu_info(), "vmem_capacity_bytes", None)
        if cap:
            return int(cap)
    except Exception:
        pass
    return 64 << 20  # conservative fallback (v7x per-TC VMEM)


def _make_mha_kernel(scale, heads_per_block, head_dim, compute_dtype, has_mask):
    # contract last dim of lhs with last dim of rhs (the "x @ W.T" pattern)
    dn_t = (((1,), (1,)), ((), ()))
    hd = heads_per_block * head_dim

    def body(q_ref, k_ref, v_ref, wq_ref, wk_ref, wv_ref, wff_t_ref,
             out_ref, attn_ref, mask_ref):
        hg = pl.program_id(2)

        # Output block is f32 and its index is constant over the head-group axis, so it is
        # resident across the reduction: accumulate directly into it (no scratch).
        @pl.when(hg == 0)
        def _():
            out_ref[...] = jnp.zeros_like(out_ref)

        # Weights are VMEM-resident (constant index_map); slice this group's rows.
        w_start = pl.multiple_of(hg * hd, hd)
        wq_g = wq_ref[pl.ds(w_start, hd), :]        # (hb*Dh, E)
        wk_g = wk_ref[pl.ds(w_start, hd), :]
        wv_g = wv_ref[pl.ds(w_start, hd), :]
        wff_g = wff_t_ref[pl.ds(w_start, hd), :]    # rows of Wff.T for this head group

        q = q_ref[0]          # (block_q, E)  compute_dtype
        k = k_ref[0]          # (sk, E)
        v = v_ref[0]          # (sk, E)

        # Group projections at full MXU width (N = hb*Dh, K = E); f32 accumulation.
        qp = lax.dot_general(q, wq_g, dn_t, preferred_element_type=jnp.float32)
        kp = lax.dot_general(k, wk_g, dn_t, preferred_element_type=jnp.float32)
        vp = lax.dot_general(v, wv_g, dn_t, preferred_element_type=jnp.float32)

        # Fold 1/sqrt(E) into the small (block_q, hb*Dh) q projection, not the scores.
        qp = (qp * scale).astype(compute_dtype)
        kp = kp.astype(compute_dtype)
        vp = vp.astype(compute_dtype)

        if mask_ref is not None:
            invalid = mask_ref[0] == 0              # (block_q, sk) from the int8 mask

        o = None
        for i in range(heads_per_block):            # short static unroll (hb <= 4)
            lo = i * head_dim
            qpi = qp[:, lo:lo + head_dim]           # (block_q, Dh) static lane slice
            kpi = kp[:, lo:lo + head_dim]
            vpi = vp[:, lo:lo + head_dim]

            # Scores + mask + numerically stable softmax (f32); divide -> EUP reciprocal.
            s = lax.dot_general(qpi, kpi, dn_t, preferred_element_type=jnp.float32)
            if mask_ref is not None:
                s = jnp.where(invalid, jnp.float32(_NEG_INF), s)
            m = jnp.max(s, axis=-1, keepdims=True)
            e = jnp.exp(s - m)
            denom = jnp.sum(e, axis=-1, keepdims=True)
            p = e * pl.reciprocal(denom, approx=True)

            attn_ref[0, i] = p.astype(attn_ref.dtype)

            # Context + this head's slice of the fused output projection.
            ctx = jnp.dot(p.astype(compute_dtype), vpi,
                          preferred_element_type=jnp.float32)            # (block_q, Dh)
            contrib = jnp.dot(ctx.astype(compute_dtype), wff_g[lo:lo + head_dim, :],
                              preferred_element_type=jnp.float32)        # (block_q, E)
            o = contrib if o is None else o + contrib

        out_ref[0] += o

    if has_mask:
        def kernel(q_ref, k_ref, v_ref, mask_ref, wq_ref, wk_ref, wv_ref, wff_t_ref,
                   out_ref, attn_ref):
            body(q_ref, k_ref, v_ref, wq_ref, wk_ref, wv_ref, wff_t_ref,
                 out_ref, attn_ref, mask_ref)
    else:
        def kernel(q_ref, k_ref, v_ref, wq_ref, wk_ref, wv_ref, wff_t_ref,
                   out_ref, attn_ref):
            body(q_ref, k_ref, v_ref, wq_ref, wk_ref, wv_ref, wff_t_ref,
                 out_ref, attn_ref, None)
    return kernel


def multihead_attention(query, key, value, wq, wk, wv, wff, num_heads,
                        attention_mask=None, *,
                        compute_dtype=jnp.bfloat16,
                        attn_dtype=jnp.float32,
                        block_q=None,
                        heads_per_block=None):
    """Pallas implementation of the PyTorch MultiheadAttention.forward.

    query/key/value: (bs, seq, embed_dim) float32
    wq/wk/wv/wff:    (embed_dim, embed_dim) float32   (nn.Linear weight, out x in)
    attention_mask:  optional (bs, seq_q, seq_k) (broadcastable); positions == 0 are masked.
    Returns (output (bs, seq_q, embed_dim) f32,
             attention_score (bs, heads, seq_q, seq_k) attn_dtype).
    """
    bs, sq, embed_dim = query.shape
    sk = key.shape[1]
    head_dim = embed_dim // num_heads
    assert head_dim * num_heads == embed_dim, "embed_dim must be divisible by num_heads"

    if heads_per_block is None:
        heads_per_block = _pick_heads_per_block(num_heads, head_dim)
    assert num_heads % heads_per_block == 0
    n_hg = num_heads // heads_per_block

    if block_q is None:
        block_q = _pick_block_q(sq)
    assert sq % block_q == 0, "block_q must divide seq_q"
    assert block_q == sq or block_q % 32 == 0, "block_q must be a multiple of 32 (or == seq_q)"
    n_q = sq // block_q

    scale = 1.0 / math.sqrt(embed_dim)  # module divides by sqrt(embed_dim), not head_dim
    has_mask = attention_mask is not None

    # bf16 matmul operands (f32 accumulation inside the kernel); halves HBM traffic.
    q_c = query.astype(compute_dtype)
    k_c = key.astype(compute_dtype)
    v_c = value.astype(compute_dtype)
    wq_c = wq.astype(compute_dtype)
    wk_c = wk.astype(compute_dtype)
    wv_c = wv.astype(compute_dtype)
    wff_t = wff.T.astype(compute_dtype)   # pre-transposed: head h slice is a row block

    kernel = _make_mha_kernel(scale, heads_per_block, head_dim, compute_dtype, has_mask)

    idx_q = lambda b, qi, hg: (b, qi, 0)     # follows the q tile
    idx_kv = lambda b, qi, hg: (b, 0, 0)     # per-batch, constant over qi/hg (fetched once)
    idx_w = lambda b, qi, hg: (0, 0)         # resident for the whole kernel

    in_specs = [
        pl.BlockSpec((1, block_q, embed_dim), idx_q),   # query tile
        pl.BlockSpec((1, sk, embed_dim), idx_kv),       # key (full key length)
        pl.BlockSpec((1, sk, embed_dim), idx_kv),       # value
    ]
    args = [q_c, k_c, v_c]
    if has_mask:
        # int8 mask (4x less DMA/VMEM than an f32 additive bias); select happens in-kernel.
        mask_i8 = jnp.broadcast_to(attention_mask != 0, (bs, sq, sk)).astype(jnp.int8)
        in_specs.append(pl.BlockSpec((1, block_q, sk), idx_q))
        args.append(mask_i8)
    in_specs += [pl.BlockSpec((embed_dim, embed_dim), idx_w)] * 4
    args += [wq_c, wk_c, wv_c, wff_t]

    out_shapes = (
        jax.ShapeDtypeStruct((bs, sq, embed_dim), jnp.float32),
        jax.ShapeDtypeStruct((bs, num_heads, sq, sk), attn_dtype),
    )
    out_specs = [
        pl.BlockSpec((1, block_q, embed_dim), lambda b, qi, hg: (b, qi, 0)),           # output
        pl.BlockSpec((1, heads_per_block, block_q, sk), lambda b, qi, hg: (b, hg, qi, 0)),
    ]

    # VMEM budget: double-buffered blocks (counted once) + headroom, clamped to the chip.
    csz = jnp.dtype(compute_dtype).itemsize
    asz = jnp.dtype(attn_dtype).itemsize
    est = (2 * (block_q * embed_dim * csz                      # q tile
                + 2 * sk * embed_dim * csz                     # k, v
                + (block_q * sk if has_mask else 0)            # int8 mask tile
                + 4 * embed_dim * embed_dim * csz)             # resident weights
           + 2 * (block_q * embed_dim * 4                      # f32 output block
                  + heads_per_block * block_q * sk * asz))     # attention block
    vmem_limit = int(min(max(est + (8 << 20), 32 << 20), int(0.9 * _vmem_cap_bytes())))

    grid_spec = pltpu.PrefetchScalarGridSpec(
        num_scalar_prefetch=0,
        grid=(bs, n_q, n_hg),                                  # head-group reduction axis last
        in_specs=in_specs,
        out_specs=out_specs,
    )

    return pl.pallas_call(
        kernel,
        out_shape=out_shapes,
        grid_spec=grid_spec,
        compiler_params=pltpu.CompilerParams(
            dimension_semantics=("parallel", "parallel", "arbitrary"),
            vmem_limit_bytes=vmem_limit),
    )(*args)


def _reference(query, key, value, wq, wk, wv, wff, num_heads, mask=None):
    bs, sq, e = query.shape
    hd = e // num_heads
    q = query @ wq.T
    k = key @ wk.T
    v = value @ wv.T
    q = q.reshape(bs, -1, num_heads, hd).transpose(0, 2, 1, 3)
    k = k.reshape(bs, -1, num_heads, hd).transpose(0, 2, 1, 3)
    v = v.reshape(bs, -1, num_heads, hd).transpose(0, 2, 1, 3)
    s = (q @ k.transpose(0, 1, 3, 2)) / math.sqrt(e)
    if mask is not None:
        s = jnp.where(mask[:, None, :, :] == 0, -jnp.inf, s)
    p = jax.nn.softmax(s, axis=-1)
    o = (p @ v).transpose(0, 2, 1, 3).reshape(bs, -1, e)
    o = o @ wff.T
    return o, p


if __name__ == "__main__":
    bs, seq, embed_dim, num_heads = 2, 64, 32, 4

    key0 = jax.random.PRNGKey(0)
    kq, kk, kv, kwq, kwk, kwv, kwf = jax.random.split(key0, 7)

    query = jax.random.normal(kq, (bs, seq, embed_dim), dtype=jnp.float32)
    key_in = jax.random.normal(kk, (bs, seq, embed_dim), dtype=jnp.float32)
    value = jax.random.normal(kv, (bs, seq, embed_dim), dtype=jnp.float32)

    # nn.Linear weights are (out_features, in_features); deterministic init.
    bound = 1.0 / math.sqrt(embed_dim)
    wq = jax.random.uniform(kwq, (embed_dim, embed_dim), jnp.float32, -bound, bound)
    wk = jax.random.uniform(kwk, (embed_dim, embed_dim), jnp.float32, -bound, bound)
    wv = jax.random.uniform(kwv, (embed_dim, embed_dim), jnp.float32, -bound, bound)
    wff = jax.random.uniform(kwf, (embed_dim, embed_dim), jnp.float32, -bound, bound)

    # Case 1: no mask, auto tiling (single q tile, single head group).
    out, attn = multihead_attention(query, key_in, value, wq, wk, wv, wff, num_heads)
    out = jax.block_until_ready(out)
    attn = jax.block_until_ready(attn)
    ref_out, ref_attn = _reference(query, key_in, value, wq, wk, wv, wff, num_heads)
    assert out.shape == (bs, seq, embed_dim)
    assert attn.shape == (bs, num_heads, seq, seq)
    # bf16 matmul inputs with f32 accumulation -> loosened tolerances vs f32 reference.
    assert jnp.allclose(out, ref_out, atol=5e-2, rtol=5e-2), \
        float(jnp.max(jnp.abs(out - ref_out)))
    assert jnp.allclose(attn, ref_attn, atol=3e-2, rtol=3e-2), \
        float(jnp.max(jnp.abs(attn - ref_attn)))

    # Case 2: causal 0/1 mask + explicit q tiling and head grouping
    # (exercises the multi-tile / multi-head-group accumulation path: grid = (2, 2, 2)).
    causal = jnp.tril(jnp.ones((seq, seq), jnp.float32))
    mask = jnp.broadcast_to(causal, (bs, seq, seq))
    out_m, attn_m = multihead_attention(query, key_in, value, wq, wk, wv, wff, num_heads,
                                        attention_mask=mask, block_q=32, heads_per_block=2)
    out_m = jax.block_until_ready(out_m)
    attn_m = jax.block_until_ready(attn_m)
    ref_out_m, ref_attn_m = _reference(query, key_in, value, wq, wk, wv, wff, num_heads, mask)
    assert jnp.allclose(out_m, ref_out_m, atol=5e-2, rtol=5e-2), \
        float(jnp.max(jnp.abs(out_m - ref_out_m)))
    assert jnp.allclose(attn_m, ref_attn_m, atol=3e-2, rtol=3e-2), \
        float(jnp.max(jnp.abs(attn_m - ref_attn_m)))

    print("KERNEL_OK")
</pallas_src>

<mosaic_0001>
module attributes {stable_mosaic.version = 11 : i64} {
  func.func @kernel(%arg0: i32, %arg1: i32, %arg2: i32, %arg3: memref<1x64x32xbf16, #tpu.memory_space<vmem>>, %arg4: memref<1x64x32xbf16, #tpu.memory_space<vmem>>, %arg5: memref<1x64x32xbf16, #tpu.memory_space<vmem>>, %arg6: memref<32x32xbf16, #tpu.memory_space<vmem>>, %arg7: memref<32x32xbf16, #tpu.memory_space<vmem>>, %arg8: memref<32x32xbf16, #tpu.memory_space<vmem>>, %arg9: memref<32x32xbf16, #tpu.memory_space<vmem>>, %arg10: memref<1x64x32xf32, #tpu.memory_space<vmem>>, %arg11: memref<1x4x64x64xf32, #tpu.memory_space<vmem>>) attributes {dimension_semantics = [#tpu.dimension_semantics<parallel>, #tpu.dimension_semantics<parallel>, #tpu.dimension_semantics<arbitrary>], iteration_bounds = array<i64: 2, 1, 1>, scalar_prefetch = 0 : i64, scratch_operands = 0 : i64, tpu.core_type = #tpu.core_type<tc>, window_params = [{transform_indices = @transform_0, window_bounds = array<i64: 1, 64, 32>}, {transform_indices = @transform_1, window_bounds = array<i64: 1, 64, 32>}, {transform_indices = @transform_2, window_bounds = array<i64: 1, 64, 32>}, {pipeline_mode = #tpu.pipeline_mode<synchronous>, transform_indices = @transform_3, window_bounds = array<i64: 32, 32>}, {pipeline_mode = #tpu.pipeline_mode<synchronous>, transform_indices = @transform_4, window_bounds = array<i64: 32, 32>}, {pipeline_mode = #tpu.pipeline_mode<synchronous>, transform_indices = @transform_5, window_bounds = array<i64: 32, 32>}, {pipeline_mode = #tpu.pipeline_mode<synchronous>, transform_indices = @transform_6, window_bounds = array<i64: 32, 32>}, {transform_indices = @transform_7, window_bounds = array<i64: 1, 64, 32>}, {transform_indices = @transform_8, window_bounds = array<i64: 1, 4, 64, 64>}]} {
    %c0_i32 = arith.constant 0 : i32
    %0 = arith.cmpi eq, %arg2, %c0_i32 : i32
    %1 = arith.extui %0 : i1 to i32
    %c0_i32_0 = arith.constant 0 : i32
    %2 = arith.cmpi ne, %1, %c0_i32_0 : i32
    scf.if %2 {
      %cst_55 = arith.constant 0.000000e+00 : f32
      %124 = vector.broadcast %cst_55 : f32 to vector<1x64x32xf32>
      %c0_56 = arith.constant 0 : index
      %c0_57 = arith.constant 0 : index
      %c0_58 = arith.constant 0 : index
      %125 = vector.load %arg10[%c0_56, %c0_57, %c0_58] : memref<1x64x32xf32, #tpu.memory_space<vmem>>, vector<1x64x32xf32>
      tpu.vector_store %arg10[%c0_56, %c0_57, %c0_58], %124 {strides = array<i32>} : memref<1x64x32xf32, #tpu.memory_space<vmem>>, vector<1x64x32xf32>,
    } else {
    }
    %c32_i32 = arith.constant 32 : i32
    %3 = arith.muli %arg2, %c32_i32 : i32
    %4 = tpu.assume_multiple %3, 32 : i32
    %5 = arith.index_cast %4 : i32 to index
    %c0 = arith.constant 0 : index
    %6 = vector.load %arg6[%5, %c0] : memref<32x32xbf16, #tpu.memory_space<vmem>>, vector<32x32xbf16>
    %7 = arith.index_cast %4 : i32 to index
    %c0_1 = arith.constant 0 : index
    %8 = vector.load %arg7[%7, %c0_1] : memref<32x32xbf16, #tpu.memory_space<vmem>>, vector<32x32xbf16>
    %9 = arith.index_cast %4 : i32 to index
    %c0_2 = arith.constant 0 : index
    %10 = vector.load %arg8[%9, %c0_2] : memref<32x32xbf16, #tpu.memory_space<vmem>>, vector<32x32xbf16>
    %11 = arith.index_cast %4 : i32 to index
    %c0_3 = arith.constant 0 : index
    %12 = vector.load %arg9[%11, %c0_3] : memref<32x32xbf16, #tpu.memory_space<vmem>>, vector<32x32xbf16>
    %c0_4 = arith.constant 0 : index
    %c0_5 = arith.constant 0 : index
    %c0_6 = arith.constant 0 : index
    %13 = vector.load %arg3[%c0_4, %c0_5, %c0_6] : memref<1x64x32xbf16, #tpu.memory_space<vmem>>, vector<1x64x32xbf16>
    %14 = vector.shape_cast %13 : vector<1x64x32xbf16> to vector<64x32xbf16>
    %c0_7 = arith.constant 0 : index
    %c0_8 = arith.constant 0 : index
    %c0_9 = arith.constant 0 : index
    %15 = vector.load %arg4[%c0_7, %c0_8, %c0_9] : memref<1x64x32xbf16, #tpu.memory_space<vmem>>, vector<1x64x32xbf16>
    %16 = vector.shape_cast %15 : vector<1x64x32xbf16> to vector<64x32xbf16>
    %c0_10 = arith.constant 0 : index
    %c0_11 = arith.constant 0 : index
    %c0_12 = arith.constant 0 : index
    %17 = vector.load %arg5[%c0_10, %c0_11, %c0_12] : memref<1x64x32xbf16, #tpu.memory_space<vmem>>, vector<1x64x32xbf16>
    %18 = vector.shape_cast %17 : vector<1x64x32xbf16> to vector<64x32xbf16>
    %cst = arith.constant dense<0.000000e+00> : vector<64x32xf32>
    %19 = tpu.matmul %14, %6, %cst {dimension_numbers = #tpu.dot_dimension_numbers<[1], [1], [0], [0], [0, 0, 1, 0], [], []>} : vector<64x32xbf16>, vector<32x32xbf16>, vector<64x32xf32> -> vector<64x32xf32>
    %cst_13 = arith.constant dense<0.000000e+00> : vector<64x32xf32>
    %20 = tpu.matmul %16, %8, %cst_13 {dimension_numbers = #tpu.dot_dimension_numbers<[1], [1], [0], [0], [0, 0, 1, 0], [], []>} : vector<64x32xbf16>, vector<32x32xbf16>, vector<64x32xf32> -> vector<64x32xf32>
    %cst_14 = arith.constant dense<0.000000e+00> : vector<64x32xf32>
    %21 = tpu.matmul %18, %10, %cst_14 {dimension_numbers = #tpu.dot_dimension_numbers<[1], [1], [0], [0], [0, 0, 1, 0], [], []>} : vector<64x32xbf16>, vector<32x32xbf16>, vector<64x32xf32> -> vector<64x32xf32>
    %cst_15 = arith.constant 0.176776692 : f32
    %22 = vector.broadcast %cst_15 : f32 to vector<64x32xf32>
    %23 = arith.mulf %19, %22 : vector<64x32xf32>
    %24 = arith.truncf %23 : vector<64x32xf32> to vector<64x32xbf16>
    %25 = arith.truncf %20 : vector<64x32xf32> to vector<64x32xbf16>
    %26 = arith.truncf %21 : vector<64x32xf32> to vector<64x32xbf16>
    %27 = vector.extract_strided_slice %24 {offsets = [0, 0], sizes = [64, 8], strides = [1, 1]} : vector<64x32xbf16> to vector<64x8xbf16>
    %28 = vector.extract_strided_slice %25 {offsets = [0, 0], sizes = [64, 8], strides = [1, 1]} : vector<64x32xbf16> to vector<64x8xbf16>
    %29 = vector.extract_strided_slice %26 {offsets = [0, 0], sizes = [64, 8], strides = [1, 1]} : vector<64x32xbf16> to vector<64x8xbf16>
    %cst_16 = arith.constant dense<0.000000e+00> : vector<64x64xf32>
    %30 = tpu.matmul %27, %28, %cst_16 {dimension_numbers = #tpu.dot_dimension_numbers<[1], [1], [0], [0], [0, 0, 1, 0], [], []>} : vector<64x8xbf16>, vector<64x8xbf16>, vector<64x64xf32> -> vector<64x64xf32>
    %cst_17 = arith.constant dense<0xFF800000> : vector<64xf32>
    %31 = vector.multi_reduction <maximumf>, %30, %cst_17 [1] : vector<64x64xf32> to vector<64xf32>
    %32 = vector.shape_cast %31 : vector<64xf32> to vector<64x1xf32>
    %33 = vector.broadcast %32 : vector<64x1xf32> to vector<64x64xf32>
    %34 = arith.subf %30, %33 : vector<64x64xf32>
    %35 = math.exp %34 : vector<64x64xf32>
    %cst_18 = arith.constant dense<0.000000e+00> : vector<64xf32>
    %36 = vector.multi_reduction <add>, %35, %cst_18 [1] : vector<64x64xf32> to vector<64xf32>
    %37 = vector.shape_cast %36 : vector<64xf32> to vector<64x1xf32>
    %38 = tpu.reciprocal %37 {approx = true} : vector<64x1xf32> -> vector<64x1xf32>
    %39 = vector.broadcast %38 : vector<64x1xf32> to vector<64x64xf32>
    %40 = arith.mulf %35, %39 : vector<64x64xf32>
    %c0_19 = arith.constant 0 : index
    %c0_20 = arith.constant 0 : index
    %c0_21 = arith.constant 0 : index
    %c0_22 = arith.constant 0 : index
    %41 = vector.load %arg11[%c0_19, %c0_20, %c0_21, %c0_22] : memref<1x4x64x64xf32, #tpu.memory_space<vmem>>, vector<1x1x64x64xf32>
    %42 = vector.shape_cast %41 : vector<1x1x64x64xf32> to vector<64x64xf32>
    %43 = vector.shape_cast %40 : vector<64x64xf32> to vector<1x1x64x64xf32>
    tpu.vector_store %arg11[%c0_19, %c0_20, %c0_21, %c0_22], %43 {strides = array<i32>} : memref<1x4x64x64xf32, #tpu.memory_space<vmem>>, vector<1x1x64x64xf32>,
    %44 = arith.truncf %40 : vector<64x64xf32> to vector<64x64xbf16>
    %cst_23 = arith.constant dense<0.000000e+00> : vector<64x8xf32>
    %45 = tpu.matmul %44, %29, %cst_23 {dimension_numbers = #tpu.dot_dimension_numbers<[1], [0], [0], [1], [0, 0, 1, 1], [], []>} : vector<64x64xbf16>, vector<64x8xbf16>, vector<64x8xf32> -> vector<64x8xf32>
    %46 = arith.truncf %45 : vector<64x8xf32> to vector<64x8xbf16>
    %47 = vector.extract_strided_slice %12 {offsets = [0, 0], sizes = [8, 32], strides = [1, 1]} : vector<32x32xbf16> to vector<8x32xbf16>
    %cst_24 = arith.constant dense<0.000000e+00> : vector<64x32xf32>
    %48 = tpu.matmul %46, %47, %cst_24 {dimension_numbers = #tpu.dot_dimension_numbers<[1], [0], [0], [1], [0, 0, 1, 1], [], []>} : vector<64x8xbf16>, vector<8x32xbf16>, vector<64x32xf32> -> vector<64x32xf32>
    %49 = vector.extract_strided_slice %24 {offsets = [0, 8], sizes = [64, 8], strides = [1, 1]} : vector<64x32xbf16> to vector<64x8xbf16>
    %50 = vector.extract_strided_slice %25 {offsets = [0, 8], sizes = [64, 8], strides = [1, 1]} : vector<64x32xbf16> to vector<64x8xbf16>
    %51 = vector.extract_strided_slice %26 {offsets = [0, 8], sizes = [64, 8], strides = [1, 1]} : vector<64x32xbf16> to vector<64x8xbf16>
    %cst_25 = arith.constant dense<0.000000e+00> : vector<64x64xf32>
    %52 = tpu.matmul %49, %50, %cst_25 {dimension_numbers = #tpu.dot_dimension_numbers<[1], [1], [0], [0], [0, 0, 1, 0], [], []>} : vector<64x8xbf16>, vector<64x8xbf16>, vector<64x64xf32> -> vector<64x64xf32>
    %cst_26 = arith.constant dense<0xFF800000> : vector<64xf32>
    %53 = vector.multi_reduction <maximumf>, %52, %cst_26 [1] : vector<64x64xf32> to vector<64xf32>
    %54 = vector.shape_cast %53 : vector<64xf32> to vector<64x1xf32>
    %55 = vector.broadcast %54 : vector<64x1xf32> to vector<64x64xf32>
    %56 = arith.subf %52, %55 : vector<64x64xf32>
    %57 = math.exp %56 : vector<64x64xf32>
    %cst_27 = arith.constant dense<0.000000e+00> : vector<64xf32>
    %58 = vector.multi_reduction <add>, %57, %cst_27 [1] : vector<64x64xf32> to vector<64xf32>
    %59 = vector.shape_cast %58 : vector<64xf32> to vector<64x1xf32>
    %60 = tpu.reciprocal %59 {approx = true} : vector<64x1xf32> -> vector<64x1xf32>
    %61 = vector.broadcast %60 : vector<64x1xf32> to vector<64x64xf32>
    %62 = arith.mulf %57, %61 : vector<64x64xf32>
    %c0_28 = arith.constant 0 : index
    %c1 = arith.constant 1 : index
    %c0_29 = arith.constant 0 : index
    %c0_30 = arith.constant 0 : index
    %63 = vector.load %arg11[%c0_28, %c1, %c0_29, %c0_30] : memref<1x4x64x64xf32, #tpu.memory_space<vmem>>, vector<1x1x64x64xf32>
    %64 = vector.shape_cast %63 : vector<1x1x64x64xf32> to vector<64x64xf32>
    %65 = vector.shape_cast %62 : vector<64x64xf32> to vector<1x1x64x64xf32>
    tpu.vector_store %arg11[%c0_28, %c1, %c0_29, %c0_30], %65 {strides = array<i32>} : memref<1x4x64x64xf32, #tpu.memory_space<vmem>>, vector<1x1x64x64xf32>,
    %66 = arith.truncf %62 : vector<64x64xf32> to vector<64x64xbf16>
    %cst_31 = arith.constant dense<0.000000e+00> : vector<64x8xf32>
    %67 = tpu.matmul %66, %51, %cst_31 {dimension_numbers = #tpu.dot_dimension_numbers<[1], [0], [0], [1], [0, 0, 1, 1], [], []>} : vector<64x64xbf16>, vector<64x8xbf16>, vector<64x8xf32> -> vector<64x8xf32>
    %68 = arith.truncf %67 : vector<64x8xf32> to vector<64x8xbf16>
    %69 = vector.extract_strided_slice %12 {offsets = [8, 0], sizes = [8, 32], strides = [1, 1]} : vector<32x32xbf16> to vector<8x32xbf16>
    %cst_32 = arith.constant dense<0.000000e+00> : vector<64x32xf32>
    %70 = tpu.matmul %68, %69, %cst_32 {dimension_numbers = #tpu.dot_dimension_numbers<[1], [0], [0], [1], [0, 0, 1, 1], [], []>} : vector<64x8xbf16>, vector<8x32xbf16>, vector<64x32xf32> -> vector<64x32xf32>
    %71 = arith.addf %48, %70 : vector<64x32xf32>
    %72 = vector.extract_strided_slice %24 {offsets = [0, 16], sizes = [64, 8], strides = [1, 1]} : vector<64x32xbf16> to vector<64x8xbf16>
    %73 = vector.extract_strided_slice %25 {offsets = [0, 16], sizes = [64, 8], strides = [1, 1]} : vector<64x32xbf16> to vector<64x8xbf16>
    %74 = vector.extract_strided_slice %26 {offsets = [0, 16], sizes = [64, 8], strides = [1, 1]} : vector<64x32xbf16> to vector<64x8xbf16>
    %cst_33 = arith.constant dense<0.000000e+00> : vector<64x64xf32>
    %75 = tpu.matmul %72, %73, %cst_33 {dimension_numbers = #tpu.dot_dimension_numbers<[1], [1], [0], [0], [0, 0, 1, 0], [], []>} : vector<64x8xbf16>, vector<64x8xbf16>, vector<64x64xf32> -> vector<64x64xf32>
    %cst_34 = arith.constant dense<0xFF800000> : vector<64xf32>
    %76 = vector.multi_reduction <maximumf>, %75, %cst_34 [1] : vector<64x64xf32> to vector<64xf32>
    %77 = vector.shape_cast %76 : vector<64xf32> to vector<64x1xf32>
    %78 = vector.broadcast %77 : vector<64x1xf32> to vector<64x64xf32>
    %79 = arith.subf %75, %78 : vector<64x64xf32>
    %80 = math.exp %79 : vector<64x64xf32>
    %cst_35 = arith.constant dense<0.000000e+00> : vector<64xf32>
    %81 = vector.multi_reduction <add>, %80, %cst_35 [1] : vector<64x64xf32> to vector<64xf32>
    %82 = vector.shape_cast %81 : vector<64xf32> to vector<64x1xf32>
    %83 = tpu.reciprocal %82 {approx = true} : vector<64x1xf32> -> vector<64x1xf32>
    %84 = vector.broadcast %83 : vector<64x1xf32> to vector<64x64xf32>
    %85 = arith.mulf %80, %84 : vector<64x64xf32>
    %c0_36 = arith.constant 0 : index
    %c2 = arith.constant 2 : index
    %c0_37 = arith.constant 0 : index
    %c0_38 = arith.constant 0 : index
    %86 = vector.load %arg11[%c0_36, %c2, %c0_37, %c0_38] : memref<1x4x64x64xf32, #tpu.memory_space<vmem>>, vector<1x1x64x64xf32>
    %87 = vector.shape_cast %86 : vector<1x1x64x64xf32> to vector<64x64xf32>
    %88 = vector.shape_cast %85 : vector<64x64xf32> to vector<1x1x64x64xf32>
    tpu.vector_store %arg11[%c0_36, %c2, %c0_37, %c0_38], %88 {strides = array<i32>} : memref<1x4x64x64xf32, #tpu.memory_space<vmem>>, vector<1x1x64x64xf32>,
    %89 = arith.truncf %85 : vector<64x64xf32> to vector<64x64xbf16>
    %cst_39 = arith.constant dense<0.000000e+00> : vector<64x8xf32>
    %90 = tpu.matmul %89, %74, %cst_39 {dimension_numbers = #tpu.dot_dimension_numbers<[1], [0], [0], [1], [0, 0, 1, 1], [], []>} : vector<64x64xbf16>, vector<64x8xbf16>, vector<64x8xf32> -> vector<64x8xf32>
    %91 = arith.truncf %90 : vector<64x8xf32> to vector<64x8xbf16>
    %92 = vector.extract_strided_slice %12 {offsets = [16, 0], sizes = [8, 32], strides = [1, 1]} : vector<32x32xbf16> to vector<8x32xbf16>
    %cst_40 = arith.constant dense<0.000000e+00> : vector<64x32xf32>
    %93 = tpu.matmul %91, %92, %cst_40 {dimension_numbers = #tpu.dot_dimension_numbers<[1], [0], [0], [1], [0, 0, 1, 1], [], []>} : vector<64x8xbf16>, vector<8x32xbf16>, vector<64x32xf32> -> vector<64x32xf32>
    %94 = arith.addf %71, %93 : vector<64x32xf32>
    %95 = vector.extract_strided_slice %24 {offsets = [0, 24], sizes = [64, 8], strides = [1, 1]} : vector<64x32xbf16> to vector<64x8xbf16>
    %96 = vector.extract_strided_slice %25 {offsets = [0, 24], sizes = [64, 8], strides = [1, 1]} : vector<64x32xbf16> to vector<64x8xbf16>
    %97 = vector.extract_strided_slice %26 {offsets = [0, 24], sizes = [64, 8], strides = [1, 1]} : vector<64x32xbf16> to vector<64x8xbf16>
    %cst_41 = arith.constant dense<0.000000e+00> : vector<64x64xf32>
    %98 = tpu.matmul %95, %96, %cst_41 {dimension_numbers = #tpu.dot_dimension_numbers<[1], [1], [0], [0], [0, 0, 1, 0], [], []>} : vector<64x8xbf16>, vector<64x8xbf16>, vector<64x64xf32> -> vector<64x64xf32>
    %cst_42 = arith.constant dense<0xFF800000> : vector<64xf32>
    %99 = vector.multi_reduction <maximumf>, %98, %cst_42 [1] : vector<64x64xf32> to vector<64xf32>
    %100 = vector.shape_cast %99 : vector<64xf32> to vector<64x1xf32>
    %101 = vector.broadcast %100 : vector<64x1xf32> to vector<64x64xf32>
    %102 = arith.subf %98, %101 : vector<64x64xf32>
    %103 = math.exp %102 : vector<64x64xf32>
    %cst_43 = arith.constant dense<0.000000e+00> : vector<64xf32>
    %104 = vector.multi_reduction <add>, %103, %cst_43 [1] : vector<64x64xf32> to vector<64xf32>
    %105 = vector.shape_cast %104 : vector<64xf32> to vector<64x1xf32>
    %106 = tpu.reciprocal %105 {approx = true} : vector<64x1xf32> -> vector<64x1xf32>
    %107 = vector.broadcast %106 : vector<64x1xf32> to vector<64x64xf32>
    %108 = arith.mulf %103, %107 : vector<64x64xf32>
    %c0_44 = arith.constant 0 : index
    %c3 = arith.constant 3 : index
    %c0_45 = arith.constant 0 : index
    %c0_46 = arith.constant 0 : index
    %109 = vector.load %arg11[%c0_44, %c3, %c0_45, %c0_46] : memref<1x4x64x64xf32, #tpu.memory_space<vmem>>, vector<1x1x64x64xf32>
    %110 = vector.shape_cast %109 : vector<1x1x64x64xf32> to vector<64x64xf32>
    %111 = vector.shape_cast %108 : vector<64x64xf32> to vector<1x1x64x64xf32>
    tpu.vector_store %arg11[%c0_44, %c3, %c0_45, %c0_46], %111 {strides = array<i32>} : memref<1x4x64x64xf32, #tpu.memory_space<vmem>>, vector<1x1x64x64xf32>,
    %112 = arith.truncf %108 : vector<64x64xf32> to vector<64x64xbf16>
    %cst_47 = arith.constant dense<0.000000e+00> : vector<64x8xf32>
    %113 = tpu.matmul %112, %97, %cst_47 {dimension_numbers = #tpu.dot_dimension_numbers<[1], [0], [0], [1], [0, 0, 1, 1], [], []>} : vector<64x64xbf16>, vector<64x8xbf16>, vector<64x8xf32> -> vector<64x8xf32>
    %114 = arith.truncf %113 : vector<64x8xf32> to vector<64x8xbf16>
    %115 = vector.extract_strided_slice %12 {offsets = [24, 0], sizes = [8, 32], strides = [1, 1]} : vector<32x32xbf16> to vector<8x32xbf16>
    %cst_48 = arith.constant dense<0.000000e+00> : vector<64x32xf32>
    %116 = tpu.matmul %114, %115, %cst_48 {dimension_numbers = #tpu.dot_dimension_numbers<[1], [0], [0], [1], [0, 0, 1, 1], [], []>} : vector<64x8xbf16>, vector<8x32xbf16>, vector<64x32xf32> -> vector<64x32xf32>
    %117 = arith.addf %94, %116 : vector<64x32xf32>
    %c0_49 = arith.constant 0 : index
    %c0_50 = arith.constant 0 : index
    %c0_51 = arith.constant 0 : index
    %118 = vector.load %arg10[%c0_49, %c0_50, %c0_51] : memref<1x64x32xf32, #tpu.memory_space<vmem>>, vector<1x64x32xf32>
    %119 = vector.shape_cast %118 : vector<1x64x32xf32> to vector<64x32xf32>
    %120 = arith.addf %119, %117 : vector<64x32xf32>
    %c0_52 = arith.constant 0 : index
    %c0_53 = arith.constant 0 : index
    %c0_54 = arith.constant 0 : index
    %121 = vector.load %arg10[%c0_52, %c0_53, %c0_54] : memref<1x64x32xf32, #tpu.memory_space<vmem>>, vector<1x64x32xf32>
    %122 = vector.shape_cast %121 : vector<1x64x32xf32> to vector<64x32xf32>
    %123 = vector.shape_cast %120 : vector<64x32xf32> to vector<1x64x32xf32>
    tpu.vector_store %arg10[%c0_52, %c0_53, %c0_54], %123 {strides = array<i32>} : memref<1x64x32xf32, #tpu.memory_space<vmem>>, vector<1x64x32xf32>,
    return
  }
  func.func @transform_0(%arg0: i32, %arg1: i32, %arg2: i32) -> (i32, i32, i32) {
    %c0_i32 = arith.constant 0 : i32
    %c0_i32_0 = arith.constant 0 : i32
    return %arg0, %arg1, %c0_i32 : i32, i32, i32
  }
  func.func @transform_1(%arg0: i32, %arg1: i32, %arg2: i32) -> (i32, i32, i32) {
    %c0_i32 = arith.constant 0 : i32
    %c0_i32_0 = arith.constant 0 : i32
    %c0_i32_1 = arith.constant 0 : i32
    return %arg0, %c0_i32, %c0_i32_0 : i32, i32, i32
  }
  func.func @transform_2(%arg0: i32, %arg1: i32, %arg2: i32) -> (i32, i32, i32) {
    %c0_i32 = arith.constant 0 : i32
    %c0_i32_0 = arith.constant 0 : i32
    %c0_i32_1 = arith.constant 0 : i32
    return %arg0, %c0_i32, %c0_i32_0 : i32, i32, i32
  }
  func.func @transform_3(%arg0: i32, %arg1: i32, %arg2: i32) -> (i32, i32) {
    %c0_i32 = arith.constant 0 : i32
    %c0_i32_0 = arith.constant 0 : i32
    %c0_i32_1 = arith.constant 0 : i32
    return %c0_i32, %c0_i32_0 : i32, i32
  }
  func.func @transform_4(%arg0: i32, %arg1: i32, %arg2: i32) -> (i32, i32) {
    %c0_i32 = arith.constant 0 : i32
    %c0_i32_0 = arith.constant 0 : i32
    %c0_i32_1 = arith.constant 0 : i32
    return %c0_i32, %c0_i32_0 : i32, i32
  }
  func.func @transform_5(%arg0: i32, %arg1: i32, %arg2: i32) -> (i32, i32) {
    %c0_i32 = arith.constant 0 : i32
    %c0_i32_0 = arith.constant 0 : i32
    %c0_i32_1 = arith.constant 0 : i32
    return %c0_i32, %c0_i32_0 : i32, i32
  }
  func.func @transform_6(%arg0: i32, %arg1: i32, %arg2: i32) -> (i32, i32) {
    %c0_i32 = arith.constant 0 : i32
    %c0_i32_0 = arith.constant 0 : i32
    %c0_i32_1 = arith.constant 0 : i32
    return %c0_i32, %c0_i32_0 : i32, i32
  }
  func.func @transform_7(%arg0: i32, %arg1: i32, %arg2: i32) -> (i32, i32, i32) {
    %c0_i32 = arith.constant 0 : i32
    %c0_i32_0 = arith.constant 0 : i32
    return %arg0, %arg1, %c0_i32 : i32, i32, i32
  }
  func.func @transform_8(%arg0: i32, %arg1: i32, %arg2: i32) -> (i32, i32, i32, i32) {
    %c0_i32 = arith.constant 0 : i32
    %c0_i32_0 = arith.constant 0 : i32
    return %arg0, %arg2, %arg1, %c0_i32 : i32, i32, i32, i32
  }
}

</mosaic_0001>

<llo_original>
// kernel: tpu_custom_call.1
$region0: #{tpu_custom_call.1}
  #allocation0 [shape = 'u32[]', space=smem, size = 0x4, offset = 0x4, fixed_abs, tag = 'smem constant byte address 0x4 - core index']
  #allocation1 [shape = 'u32[144,128]{1,0:T(1,128)}', space=vmem, size = 0x12000, scoped, tag = 'internal scratch']
  %s0 = inlined_call_operand.vmem [shape: bf16[2,64,32], index: 0, kind: input, shape index: {}]
  %s1 = inlined_call_operand.vmem [shape: bf16[2,64,32], index: 1, kind: input, shape index: {}]
  %s2 = inlined_call_operand.vmem [shape: bf16[2,64,32], index: 2, kind: input, shape index: {}]
  %s3 = inlined_call_operand.vmem [shape: bf16[32,32], index: 3, kind: input, shape index: {}]
  %s4 = inlined_call_operand.vmem [shape: bf16[32,32], index: 4, kind: input, shape index: {}]
  %s5 = inlined_call_operand.vmem [shape: bf16[32,32], index: 5, kind: input, shape index: {}]
  %s6 = inlined_call_operand.vmem [shape: bf16[32,32], index: 6, kind: input, shape index: {}]
  %s7 = inlined_call_operand.vmem [shape: f32[2,64,32], index: 7, kind: output, shape index: {0}]
  %s8 = inlined_call_operand.hbm [shape: f32[2,4,64,64], index: 8, kind: output, shape index: {1}]
  %9 = xla_tuple %s7, %s8
  %s10 = sld [smem:[#allocation0]]
  $region73: #{tpu_custom_call.1} parent=0
    _
  %s12 = ssub.s32 1, %s10
  %s13 = scalar_select 0, %s12, %s10
  $region1: #{tpu_custom_call.1} parent=0
    #allocation2 [shape = 'u8[262144]{0}', space=vmem, size = 0x40000, scoped, tag = 'output window, operand 1']
    #allocation3 [shape = 's32[2]{0}', space=sflag, size = 0x8, scoped, tag = 'scoped memory for tpu_custom_call.1']
    %14 = vsyncpa [#allocation3], 0
    %s15 = scalar_lea.sflag [#allocation3], 1
    %16 = vsyncpa %s15, 0
    loop: start=0, step=1, limit=4
    $region2: #{tpu_custom_call.1} parent=1 // loop_pre_header
      _
    $region3: #{tpu_custom_call.1} parent=1 // loop_header
      %s18 = sphi 0, %s22
      %p19 = scmp.ge.s32.totalorder %s18, 4
      %s25 = sphi 0, %s44
      %s26 = sphi 0, %s40
      %s27 = sphi 0, %s36
      %s28 = sphi 0, %s25
      %s29 = sphi 0, %s26
      %s30 = sphi 0, %s27
      %s31 = sphi 0, %s28
      %s32 = sphi 0, %s29
      %s33 = sphi 0, %s30
      %s49 = sphi 0, %s51
      %s52 = sphi 0, %s49
      %s53 = sphi 0, %s52
      %s69 = sphi 0, %s53
      %s75 = sphi 0, %s77
      %s78 = sphi 0, %s75
      %s79 = sphi 0, %s78
      %s95 = sphi 0, %s79
      %s101 = sphi 0, %s103
      %s104 = sphi 0, %s101
      %s105 = sphi 0, %s104
      %s121 = sphi 0, %s105
      %s125 = sphi 0, %s125
      %s127 = sphi 0, %s125
      %s128 = sphi 0, %s127
      %s142 = sphi 0, %s128
      %s146 = sphi 0, %s146
      %s148 = sphi 0, %s146
      %s149 = sphi 0, %s148
      %s163 = sphi 0, %s149
      %s167 = sphi 0, %s167
      %s169 = sphi 0, %s167
      %s170 = sphi 0, %s169
      %s184 = sphi 0, %s170
      %s188 = sphi 0, %s188
      %s190 = sphi 0, %s188
      %s191 = sphi 0, %s190
      %s205 = sphi 0, %s191
      %s213 = sphi 0, %s215
      %s216 = sphi 0, %s213
      %s217 = sphi 0, %s216
      %s233 = sphi 0, %s217
      %s243 = sphi 0, %s245
      %s246 = sphi 0, %s243
      %s247 = sphi 0, %s246
      %s263 = sphi 0, %s247
    $region4: #{tpu_custom_call.1} parent=1 // loop_header_branch
      %21 = sbr.rel (%p19) target = $region8
    $region5: #{tpu_custom_call.1} parent=1 // loop_body
      %s23 = ssub.s32 %s18, 1
      %s24 = ssub.s32 %s18, 2
      %s34 = sadd.s32 1, %s27
      %p35 = scmp.ge.s32.totalorder %s34, 1
      %s36 = scalar_select %p35, 0, %s34
      %s37 = sadd.s32 1, %s26
      %s38 = scalar_select %p35, %s37, %s26
      %p39 = scmp.ge.s32.totalorder %s38, 1
      %s40 = scalar_select %p39, 0, %s38
      %s41 = sadd.s32 1, %s25
      %s42 = scalar_select %p39, %s41, %s25
      %p43 = scmp.ge.s32.totalorder %s42, 2
      %s44 = scalar_select %p43, 0, %s42
      %s45 = ssub.s32 %s25, %s44
      %s46 = ssub.s32 %s26, %s40
      %s47 = sor.u32 %s45, %s46
      %p48 = scmp.eq.s32.totalorder %s47, 0
      %s50 = sadd.s32 %s49, 1
      %s51 = scalar_select %p48, %s49, %s50
      %p54 = pneg %p48
      %p55 = scmp.eq.s32.totalorder %s18, 1
      %p56 = por %p54, %p55
      %p57 = scmp.ne.s32.totalorder %s49, %s52
      %p58 = scmp.eq.s32.totalorder %s18, 0
      %p59 = por %p57, %p58
      %p60 = scmp.ne.s32.totalorder %s49, %s52
      %p61 = scmp.eq.s32.totalorder %s23, 1
      %p62 = por %p60, %p61
      %p63 = scmp.ne.s32.totalorder %s52, %s53
      %p64 = scmp.eq.s32.totalorder %s23, 0
      %p65 = por %p63, %p64
      %p66 = scmp.ne.s32.totalorder %s52, %s53
      %p67 = scmp.eq.s32.totalorder %s24, 1
      %p68 = por %p66, %p67
      %p70 = scmp.ne.s32.totalorder %s53, %s69
      %p71 = scmp.eq.s32.totalorder %s24, 0
      %p72 = por %p70, %p71
      %s73 = ssub.s32 %s25, %s44
      %p74 = scmp.eq.s32.totalorder %s73, 0
      %s76 = sadd.s32 %s75, 1
      %s77 = scalar_select %p74, %s75, %s76
      %p80 = pneg %p74
      %p81 = scmp.eq.s32.totalorder %s18, 1
      %p82 = por %p80, %p81
      %p83 = scmp.ne.s32.totalorder %s75, %s78
      %p84 = scmp.eq.s32.totalorder %s18, 0
      %p85 = por %p83, %p84
      %p86 = scmp.ne.s32.totalorder %s75, %s78
      %p87 = scmp.eq.s32.totalorder %s23, 1
      %p88 = por %p86, %p87
      %p89 = scmp.ne.s32.totalorder %s78, %s79
      %p90 = scmp.eq.s32.totalorder %s23, 0
      %p91 = por %p89, %p90
      %p92 = scmp.ne.s32.totalorder %s78, %s79
      %p93 = scmp.eq.s32.totalorder %s24, 1
      %p94 = por %p92, %p93
      %p96 = scmp.ne.s32.totalorder %s79, %s95
      %p97 = scmp.eq.s32.totalorder %s24, 0
      %p98 = por %p96, %p97
      %s99 = ssub.s32 %s25, %s44
      %p100 = scmp.eq.s32.totalorder %s99, 0
      %s102 = sadd.s32 %s101, 1
      %s103 = scalar_select %p100, %s101, %s102
      %p106 = pneg %p100
      %p107 = scmp.eq.s32.totalorder %s18, 1
      %p108 = por %p106, %p107
      %p109 = scmp.ne.s32.totalorder %s101, %s104
      %p110 = scmp.eq.s32.totalorder %s18, 0
      %p111 = por %p109, %p110
      %p112 = scmp.ne.s32.totalorder %s101, %s104
      %p113 = scmp.eq.s32.totalorder %s23, 1
      %p114 = por %p112, %p113
      %p115 = scmp.ne.s32.totalorder %s104, %s105
      %p116 = scmp.eq.s32.totalorder %s23, 0
      %p117 = por %p115, %p116
      %p118 = scmp.ne.s32.totalorder %s104, %s105
      %p119 = scmp.eq.s32.totalorder %s24, 1
      %p120 = por %p118, %p119
      %p122 = scmp.ne.s32.totalorder %s105, %s121
      %p123 = scmp.eq.s32.totalorder %s24, 0
      %p124 = por %p122, %p123
      %s126 = sadd.s32 %s125, 1
      %p129 = scmp.eq.s32.totalorder %s18, 1
      %p130 = scmp.ne.s32.totalorder %s125, %s127
      %p131 = scmp.eq.s32.totalorder %s18, 0
      %p132 = por %p130, %p131
      %p133 = scmp.ne.s32.totalorder %s125, %s127
      %p134 = scmp.eq.s32.totalorder %s23, 1
      %p135 = por %p133, %p134
      %p136 = scmp.ne.s32.totalorder %s127, %s128
      %p137 = scmp.eq.s32.totalorder %s23, 0
      %p138 = por %p136, %p137
      %p139 = scmp.ne.s32.totalorder %s127, %s128
      %p140 = scmp.eq.s32.totalorder %s24, 1
      %p141 = por %p139, %p140
      %p143 = scmp.ne.s32.totalorder %s128, %s142
      %p144 = scmp.eq.s32.totalorder %s24, 0
      %p145 = por %p143, %p144
      %s147 = sadd.s32 %s146, 1
      %p150 = scmp.eq.s32.totalorder %s18, 1
      %p151 = scmp.ne.s32.totalorder %s146, %s148
      %p152 = scmp.eq.s32.totalorder %s18, 0
      %p153 = por %p151, %p152
      %p154 = scmp.ne.s32.totalorder %s146, %s148
      %p155 = scmp.eq.s32.totalorder %s23, 1
      %p156 = por %p154, %p155
      %p157 = scmp.ne.s32.totalorder %s148, %s149
      %p158 = scmp.eq.s32.totalorder %s23, 0
      %p159 = por %p157, %p158
      %p160 = scmp.ne.s32.totalorder %s148, %s149
      %p161 = scmp.eq.s32.totalorder %s24, 1
      %p162 = por %p160, %p161
      %p164 = scmp.ne.s32.totalorder %s149, %s163
      %p165 = scmp.eq.s32.totalorder %s24, 0
      %p166 = por %p164, %p165
      %s168 = sadd.s32 %s167, 1
      %p171 = scmp.eq.s32.totalorder %s18, 1
      %p172 = scmp.ne.s32.totalorder %s167, %s169
      %p173 = scmp.eq.s32.totalorder %s18, 0
      %p174 = por %p172, %p173
      %p175 = scmp.ne.s32.totalorder %s167, %s169
      %p176 = scmp.eq.s32.totalorder %s23, 1
      %p177 = por %p175, %p176
      %p178 = scmp.ne.s32.totalorder %s169, %s170
      %p179 = scmp.eq.s32.totalorder %s23, 0
      %p180 = por %p178, %p179
      %p181 = scmp.ne.s32.totalorder %s169, %s170
      %p182 = scmp.eq.s32.totalorder %s24, 1
      %p183 = por %p181, %p182
      %p185 = scmp.ne.s32.totalorder %s170, %s184
      %p186 = scmp.eq.s32.totalorder %s24, 0
      %p187 = por %p185, %p186
      %s189 = sadd.s32 %s188, 1
      %p192 = scmp.eq.s32.totalorder %s18, 1
      %p193 = scmp.ne.s32.totalorder %s188, %s190
      %p194 = scmp.eq.s32.totalorder %s18, 0
      %p195 = por %p193, %p194
      %p196 = scmp.ne.s32.totalorder %s188, %s190
      %p197 = scmp.eq.s32.totalorder %s23, 1
      %p198 = por %p196, %p197
      %p199 = scmp.ne.s32.totalorder %s190, %s191
      %p200 = scmp.eq.s32.totalorder %s23, 0
      %p201 = por %p199, %p200
      %p202 = scmp.ne.s32.totalorder %s190, %s191
      %p203 = scmp.eq.s32.totalorder %s24, 1
      %p204 = por %p202, %p203
      %p206 = scmp.ne.s32.totalorder %s191, %s205
      %p207 = scmp.eq.s32.totalorder %s24, 0
      %p208 = por %p206, %p207
      %s209 = ssub.s32 %s25, %s44
      %s210 = ssub.s32 %s26, %s40
      %s211 = sor.u32 %s209, %s210
      %p212 = scmp.eq.s32.totalorder %s211, 0
      %s214 = sadd.s32 %s213, 1
      %s215 = scalar_select %p212, %s213, %s214
      %p218 = pneg %p212
      %p219 = scmp.eq.s32.totalorder %s18, 1
      %p220 = por %p218, %p219
      %p221 = scmp.ne.s32.totalorder %s213, %s216
      %p222 = scmp.eq.s32.totalorder %s18, 0
      %p223 = por %p221, %p222
      %p224 = scmp.ne.s32.totalorder %s213, %s216
      %p225 = scmp.eq.s32.totalorder %s23, 1
      %p226 = por %p224, %p225
      %p227 = scmp.ne.s32.totalorder %s216, %s217
      %p228 = scmp.eq.s32.totalorder %s23, 0
      %p229 = por %p227, %p228
      %p230 = scmp.ne.s32.totalorder %s216, %s217
      %p231 = scmp.eq.s32.totalorder %s24, 1
      %p232 = por %p230, %p231
      %p234 = scmp.ne.s32.totalorder %s217, %s233
      %p235 = scmp.eq.s32.totalorder %s24, 0
      %p236 = por %p234, %p235
      %s237 = ssub.s32 %s25, %s44
      %s238 = ssub.s32 %s27, %s36
      %s239 = sor.u32 %s237, %s238
      %s240 = ssub.s32 %s26, %s40
      %s241 = sor.u32 %s239, %s240
      %p242 = scmp.eq.s32.totalorder %s241, 0
      %s244 = sadd.s32 %s243, 1
      %s245 = scalar_select %p242, %s243, %s244
      %p248 = pneg %p242
      %p249 = scmp.eq.s32.totalorder %s18, 1
      %p250 = por %p248, %p249
      %p251 = scmp.ne.s32.totalorder %s243, %s246
      %p252 = scmp.eq.s32.totalorder %s18, 0
      %p253 = por %p251, %p252
      %p254 = scmp.ne.s32.totalorder %s243, %s246
      %p255 = scmp.eq.s32.totalorder %s23, 1
      %p256 = por %p254, %p255
      %p257 = scmp.ne.s32.totalorder %s246, %s247
      %p258 = scmp.eq.s32.totalorder %s23, 0
      %p259 = por %p257, %p258
      %p260 = scmp.ne.s32.totalorder %s246, %s247
      %p261 = scmp.eq.s32.totalorder %s24, 1
      %p262 = por %p260, %p261
      %p264 = scmp.ne.s32.totalorder %s247, %s263
      %p265 = scmp.eq.s32.totalorder %s24, 0
      %p266 = por %p264, %p265
      %p267 = scmp.le.s32.totalorder 1, %s18
      %p268 = scmp.lt.s32.totalorder %s18, 3
      %p269 = pnand %p267, %p268
      %p270 = pneg %p269
      // Predicated region
      $region9: #{tpu_custom_call.1} parent=5 // pred_check
        _
      $region10: #{tpu_custom_call.1} parent=5 // pred_check_branch
        %272 = sbr.rel (%p269) target = $region12
      $region11: #{tpu_custom_call.1} parent=5 // pred_region
        %s273 = ssub.s32 %s18, 1
        // Predicated region
        $region13: #{tpu_custom_call.1} parent=11 // pred_check
          %p274 = pneg %p138
        $region14: #{tpu_custom_call.1} parent=11 // pred_check_branch
          %276 = sbr.rel (%p274) target = $region16
        $region15: #{tpu_custom_call.1} parent=11 // pred_region
          _
        $region16: #{tpu_custom_call.1} parent=11 // pred_fallthru
          _
        // Predicated region
        $region17: #{tpu_custom_call.1} parent=11 // pred_check
          %p277 = pneg %p159
        $region18: #{tpu_custom_call.1} parent=11 // pred_check_branch
          %279 = sbr.rel (%p277) target = $region20
        $region19: #{tpu_custom_call.1} parent=11 // pred_region
          _
        $region20: #{tpu_custom_call.1} parent=11 // pred_fallthru
          _
        // Predicated region
        $region21: #{tpu_custom_call.1} parent=11 // pred_check
          %p280 = pneg %p180
        $region22: #{tpu_custom_call.1} parent=11 // pred_check_branch
          %282 = sbr.rel (%p280) target = $region24
        $region23: #{tpu_custom_call.1} parent=11 // pred_region
          _
        $region24: #{tpu_custom_call.1} parent=11 // pred_fallthru
          _
        // Predicated region
        $region25: #{tpu_custom_call.1} parent=11 // pred_check
          %p283 = pneg %p201
        $region26: #{tpu_custom_call.1} parent=11 // pred_check_branch
          %285 = sbr.rel (%p283) target = $region28
        $region27: #{tpu_custom_call.1} parent=11 // pred_region
          _
        $region28: #{tpu_custom_call.1} parent=11 // pred_fallthru
          _
      $region12: #{tpu_custom_call.1} parent=5 // pred_fallthru
        _
      %p286 = scmp.lt.s32.totalorder %s18, 2
      // Predicated region
      $region29: #{tpu_custom_call.1} parent=5 // pred_check
        %p287 = pneg %p286
      $region30: #{tpu_custom_call.1} parent=5 // pred_check_branch
        %289 = sbr.rel (%p287) target = $region32
      $region31: #{tpu_custom_call.1} parent=5 // pred_region
        // Predicated region
        $region33: #{tpu_custom_call.1} parent=31 // pred_check
          %p290 = pneg %p59
        $region34: #{tpu_custom_call.1} parent=31 // pred_check_branch
          %292 = sbr.rel (%p290) target = $region36
        $region35: #{tpu_custom_call.1} parent=31 // pred_region
          %s293 = smul.u32 8, %s26
          %p294 = scmp.lt.s32.totalorder %s25, 1
          %s295 = scalar_select %p294, %s25, 1
          %p296 = scmp.lt.s32.totalorder %s293, 7
          %s297 = scalar_select %p296, %s293, 7
          %s298 = smul.addr %s295, 8
          %s299 = sadd.s32 %s297, %s298
          %s300 = smul.addr %s299, 4
          %s301 = scalar_lea.vmem %s0, %s300
          %s302 = smul.u32 8, %s26
        $region36: #{tpu_custom_call.1} parent=31 // pred_fallthru
          _
        // Predicated region
        $region37: #{tpu_custom_call.1} parent=31 // pred_check
          %p303 = pneg %p85
        $region38: #{tpu_custom_call.1} parent=31 // pred_check_branch
          %305 = sbr.rel (%p303) target = $region40
        $region39: #{tpu_custom_call.1} parent=31 // pred_region
          %p306 = scmp.lt.s32.totalorder %s25, 1
          %s307 = scalar_select %p306, %s25, 1
          %s308 = smul.addr %s307, 8
          %s309 = smul.addr %s308, 4
          %s310 = scalar_lea.vmem %s1, %s309
        $region40: #{tpu_custom_call.1} parent=31 // pred_fallthru
          _
        // Predicated region
        $region41: #{tpu_custom_call.1} parent=31 // pred_check
          %p311 = pneg %p111
        $region42: #{tpu_custom_call.1} parent=31 // pred_check_branch
          %313 = sbr.rel (%p311) target = $region44
        $region43: #{tpu_custom_call.1} parent=31 // pred_region
          %p314 = scmp.lt.s32.totalorder %s25, 1
          %s315 = scalar_select %p314, %s25, 1
          %s316 = smul.addr %s315, 8
          %s317 = smul.addr %s316, 4
          %s318 = scalar_lea.vmem %s2, %s317
        $region44: #{tpu_custom_call.1} parent=31 // pred_fallthru
          _
      $region32: #{tpu_custom_call.1} parent=5 // pred_fallthru
        _
      %p319 = scmp.le.s32.totalorder 1, %s18
      %p320 = scmp.lt.s32.totalorder %s18, 3
      %p321 = pnand %p319, %p320
      %p322 = pneg %p321
      // Predicated region
      $region45: #{tpu_custom_call.1} parent=5 // pred_check
        _
      $region46: #{tpu_custom_call.1} parent=5 // pred_check_branch
        %324 = sbr.rel (%p321) target = $region48
      $region47: #{tpu_custom_call.1} parent=5 // pred_region
        %s325 = ssub.s32 %s18, 1
        %s326 = smul.u32 8, %s29
        %p327 = scmp.lt.s32.totalorder %s28, 1
        %s328 = scalar_select %p327, %s28, 1
        %p329 = scmp.lt.s32.totalorder %s326, 7
        %s330 = scalar_select %p329, %s326, 7
        %s331 = smul.addr %s328, 8
        %s332 = sadd.s32 %s330, %s331
        %s333 = smul.addr %s332, 4
        %s334 = scalar_lea.vmem %s0, %s333
        %p335 = pneg %p65
        %p336 = pneg %p62
        %p337 = scmp.lt.s32.totalorder %s28, 1
        %s338 = scalar_select %p337, %s28, 1
        %s339 = smul.addr %s338, 8
        %s340 = smul.addr %s339, 4
        %s341 = scalar_lea.vmem %s1, %s340
        %p342 = pneg %p91
        %p343 = pneg %p88
        %p344 = scmp.lt.s32.totalorder %s28, 1
        %s345 = scalar_select %p344, %s28, 1
        %s346 = smul.addr %s345, 8
        %s347 = smul.addr %s346, 4
        %s348 = scalar_lea.vmem %s2, %s347
        %p349 = pneg %p117
        %p350 = pneg %p114
        %p351 = pneg %p138
        %p352 = pneg %p135
        %p353 = pneg %p159
        %p354 = pneg %p156
        %p355 = pneg %p180
        %p356 = pneg %p177
        %p357 = pneg %p201
        %p358 = pneg %p198
        %p359 = pneg %p229
        %p360 = pneg %p226
        %s361 = smul.u32 8, %s29
        %p362 = scmp.lt.s32.totalorder %s28, 1
        %s363 = scalar_select %p362, %s28, 1
        %p364 = scmp.lt.s32.totalorder %s361, 7
        %s365 = scalar_select %p364, %s361, 7
        %s366 = smul.addr %s363, 8
        %s367 = sadd.s32 %s365, %s366
        %s368 = smul.addr %s367, 8
        %s369 = scalar_lea.vmem %s7, %s368
        %p370 = pneg %p259
        %p371 = pneg %p256
        %s372 = sand.u32 %s246, 1
        %s373 = scalar_lea.sflag [#allocation3], %s372
        %s374 = sand.u32 %s246, 1
        %s375 = smul.addr %s374, 256
        %s376 = scalar_lea.vmem [#allocation2], %s375
        %s377 = smul.u32 8, %s29
        %p378 = scmp.lt.s32.totalorder %s28, 1
        %s379 = scalar_select %p378, %s28, 1
        %p380 = scmp.lt.s32.totalorder %s377, 7
        %s381 = scalar_select %p380, %s377, 7
        %s382 = smul.addr %s379, 8
        %s383 = sadd.s32 %s381, %s382
        %s384 = smul.addr %s383, 4
        %s385 = scalar_lea.vmem %s0, %s384
        %s386 = smul.u32 8, %s29
        %p387 = scmp.lt.s32.totalorder %s28, 1
        %s388 = scalar_select %p387, %s28, 1
        %s389 = smul.addr %s388, 8
        %s390 = smul.addr %s389, 4
        %s391 = scalar_lea.vmem %s1, %s390
        %p392 = scmp.lt.s32.totalorder %s28, 1
        %s393 = scalar_select %p392, %s28, 1
        %s394 = smul.addr %s393, 8
        %s395 = smul.addr %s394, 4
        %s396 = scalar_lea.vmem %s2, %s395
        %s397 = smul.u32 8, %s29
        %p398 = scmp.lt.s32.totalorder %s28, 1
        %s399 = scalar_select %p398, %s28, 1
        %p400 = scmp.lt.s32.totalorder %s397, 7
        %s401 = scalar_select %p400, %s397, 7
        %s402 = smul.addr %s399, 8
        %s403 = sadd.s32 %s401, %s402
        %s404 = smul.addr %s403, 8
        %s405 = scalar_lea.vmem %s7, %s404
        %s406 = smul.u32 8, %s29
        %s407 = smul.u32 4, %s30
        %s408 = smul.u32 8, %s29
        %p410 = scmp.eq.s32.totalorder %s30, 0
        // Predicated region
        $region49: #{tpu_custom_call.1} parent=47 // pred_check
          %p411 = pneg %p410
        $region50: #{tpu_custom_call.1} parent=47 // pred_check_branch
          %413 = sbr.rel (%p411) target = $region52
        $region51: #{tpu_custom_call.1} parent=47 // pred_region
          %vm414 = vcmask 261120
          %415 = vst.msk [vmem:[%s405] sm:$0xff] %vm414, 0.0
          %416 = vst.msk [vmem:[%s405 + $0x8] sm:$0xff] %vm414, 0.0
          %417 = vst.msk [vmem:[%s405 + $0x10] sm:$0xff] %vm414, 0.0
          %418 = vst.msk [vmem:[%s405 + $0x18] sm:$0xff] %vm414, 0.0
          %419 = vst.msk [vmem:[%s405 + $0x20] sm:$0xff] %vm414, 0.0
          %420 = vst.msk [vmem:[%s405 + $0x28] sm:$0xff] %vm414, 0.0
          %421 = vst.msk [vmem:[%s405 + $0x30] sm:$0xff] %vm414, 0.0
          %422 = vst.msk [vmem:[%s405 + $0x38] sm:$0xff] %vm414, 0.0
        $region52: #{tpu_custom_call.1} parent=47 // pred_fallthru
          _
        %s423 = smul.u32 %s30, 32
        %s424 = sshra.s32 %s423, 3
        %s425 = sand.u32 %s423, 7
        %s426 = smul.addr %s424, 4
        %s427 = scalar_lea.vmem %s3, %s426
        %v428 = vld [vmem:[%s427] sm:$0xf]
        %v429 = vld [vmem:[%s427 + $0x4] sm:$0xf]
        %v430 = vld [vmem:[%s427 + $0x8] sm:$0xf]
        %v431 = vld [vmem:[%s427 + $0xc] sm:$0xf]
        %s432 = smul.addr %s424, 4
        %s433 = scalar_lea.vmem %s4, %s432
        %v434 = vld [vmem:[%s433] sm:$0xf]
        %v435 = vld [vmem:[%s433 + $0x4] sm:$0xf]
        %v436 = vld [vmem:[%s433 + $0x8] sm:$0xf]
        %v437 = vld [vmem:[%s433 + $0xc] sm:$0xf]
        %s438 = smul.addr %s424, 4
        %s439 = scalar_lea.vmem %s5, %s438
        %v440 = vld [vmem:[%s439] sm:$0xf]
        %v441 = vld [vmem:[%s439 + $0x4] sm:$0xf]
        %v442 = vld [vmem:[%s439 + $0x8] sm:$0xf]
        %v443 = vld [vmem:[%s439 + $0xc] sm:$0xf]
        %s444 = smul.addr %s424, 4
        %s445 = scalar_lea.vmem %s6, %s444
        %v446 = vld [vmem:[%s445] sm:$0xf]
        %v447 = vld [vmem:[%s445 + $0x4] sm:$0xf]
        %v448 = vld [vmem:[%s445 + $0x8] sm:$0xf]
        %v449 = vld [vmem:[%s445 + $0xc] sm:$0xf]
        %v450 = vld [vmem:[%s385] sm:$0xf]
        %v451 = vld [vmem:[%s385 + $0x4] sm:$0xf]
        %v452 = vld [vmem:[%s385 + $0x8] sm:$0xf]
        %v453 = vld [vmem:[%s385 + $0xc] sm:$0xf]
        %v454 = vld [vmem:[%s385 + $0x10] sm:$0xf]
        %v455 = vld [vmem:[%s385 + $0x14] sm:$0xf]
        %v456 = vld [vmem:[%s385 + $0x18] sm:$0xf]
        %v457 = vld [vmem:[%s385 + $0x1c] sm:$0xf]
        %v458 = vld [vmem:[%s391] sm:$0xf]
        %v459 = vld [vmem:[%s391 + $0x4] sm:$0xf]
        %v460 = vld [vmem:[%s391 + $0x8] sm:$0xf]
        %v461 = vld [vmem:[%s391 + $0xc] sm:$0xf]
        %v462 = vld [vmem:[%s391 + $0x10] sm:$0xf]
        %v463 = vld [vmem:[%s391 + $0x14] sm:$0xf]
        %v464 = vld [vmem:[%s391 + $0x18] sm:$0xf]
        %v465 = vld [vmem:[%s391 + $0x1c] sm:$0xf]
        %v466 = vld [vmem:[%s396] sm:$0xf]
        %v467 = vld [vmem:[%s396 + $0x4] sm:$0xf]
        %v468 = vld [vmem:[%s396 + $0x8] sm:$0xf]
        %v469 = vld [vmem:[%s396 + $0xc] sm:$0xf]
        %v470 = vld [vmem:[%s396 + $0x10] sm:$0xf]
        %v471 = vld [vmem:[%s396 + $0x14] sm:$0xf]
        %v472 = vld [vmem:[%s396 + $0x18] sm:$0xf]
        %v473 = vld [vmem:[%s396 + $0x1c] sm:$0xf]
        %v482 = vunpack.c.l.b16 %v450
        %v483 = vunpack.c.l.b16 %v451
        %v484 = vunpack.c.l.b16 %v452
        %v485 = vunpack.c.l.b16 %v453
        %v486 = vunpack.c.l.b16 %v454
        %v487 = vunpack.c.l.b16 %v455
        %v488 = vunpack.c.l.b16 %v456
        %v489 = vunpack.c.l.b16 %v457
        %v490 = vpack.c.b16 %v483, %v482
        %v491 = vpack.c.b16 %v485, %v484
        %v492 = vpack.c.b16 %v487, %v486
        %v493 = vpack.c.b16 %v489, %v488
        %v498 = vunpack.c.l.b16 %v428
        %v499 = vunpack.c.l.b16 %v429
        %v500 = vunpack.c.l.b16 %v430
        %v501 = vunpack.c.l.b16 %v431
        %v502 = vpack.c.b16 %v499, %v498
        %v503 = vpack.c.b16 %v501, %v500
        %vm504 = vcmask 261120
        %v506 = vsel %vm504, %v490, 0
        %v509 = vsel %vm504, %v491, 0
        %v512 = vsel %vm504, %v492, 0
        %v515 = vsel %vm504, %v493, 0
        %v518 = vsel %vm504, %v502, 0
        %v521 = vsel %vm504, %v503, 0
        %523 = vmatprep.subr.bf16.mxu0 0
        %524 = vmatpush1.bf16.xpose.msra.mxu0 %v518
        %525 = vmatprep.subr.bf16.mxu0 0
        %526 = vmatpush1.bf16.xpose.msra.mxu0 %v521
        %527 = vmatprep.subr.bf16.mxu0 0
        %528 = vmatpush1.bf16.xpose.msra.mxu0 0
        %529 = vmatprep.subr.bf16.mxu0 0
        %530 = vmatpush1.bf16.xpose.msra.mxu0 0
        %531 = vmatprep.subr.bf16.mxu0 0
        %532 = vmatpush1.bf16.xpose.msra.mxu0 0
        %533 = vmatprep.subr.bf16.mxu0 0
        %534 = vmatpush1.bf16.xpose.msra.mxu0 0
        %535 = vmatprep.subr.bf16.mxu0 0
        %536 = vmatpush1.bf16.xpose.msra.mxu0 0
        %537 = vmatprep.subr.bf16.mxu0 0
        %538 = vmatpush1.bf16.xpose.msra.mxu0 0
        %539 = vmatprep.subr.bf16.mxu0 0
        %540 = vmatpush1.bf16.xpose.msra.mxu0 0
        %541 = vmatprep.subr.bf16.mxu0 0
        %542 = vmatpush1.bf16.xpose.msra.mxu0 0
        %543 = vmatprep.subr.bf16.mxu0 0
        %544 = vmatpush1.bf16.xpose.msra.mxu0 0
        %545 = vmatprep.subr.bf16.mxu0 0
        %546 = vmatpush1.bf16.xpose.msra.mxu0 0
        %547 = vmatprep.subr.bf16.mxu0 0
        %548 = vmatpush1.bf16.xpose.msra.mxu0 0
        %549 = vmatprep.subr.bf16.mxu0 0
        %550 = vmatpush1.bf16.xpose.msra.mxu0 0
        %551 = vmatprep.subr.bf16.mxu0 0
        %552 = vmatpush1.bf16.xpose.msra.mxu0 0
        %553 = vmatprep.subr.bf16.mxu0 0
        %554 = vmatpush1.bf16.xpose.msra.mxu0 0
        %555 = vmatprep.mubr.bf16.mxu0 0
        %556 = vmatmul.mubr.bf16.gmra.mrb[0].mxu0 %v506
        %v557 = vpop.f32.mrb[0].mxu0
        %v558 = vadd.f32 0.0, %v557
        %v559 = vpop.f32.mrb[0].mxu0
        %v560 = vpop.f32.mrb[0].mxu0
        %v561 = vadd.f32 0.0, %v560
        %v562 = vpop.f32.mrb[0].mxu0
        %563 = vmatprep.mubr.bf16.mxu0 0
        %564 = vmatmul.mubr.bf16.gmra.mrb[0].mxu0 %v509
        %v565 = vpop.f32.mrb[0].mxu0
        %v566 = vadd.f32 0.0, %v565
        %v567 = vpop.f32.mrb[0].mxu0
        %v568 = vpop.f32.mrb[0].mxu0
        %v569 = vadd.f32 0.0, %v568
        %v570 = vpop.f32.mrb[0].mxu0
        %571 = vmatprep.mubr.bf16.mxu0 0
        %572 = vmatmul.mubr.bf16.gmra.mrb[0].mxu0 %v512
        %v573 = vpop.f32.mrb[0].mxu0
        %v574 = vadd.f32 0.0, %v573
        %v575 = vpop.f32.mrb[0].mxu0
        %v576 = vpop.f32.mrb[0].mxu0
        %v577 = vadd.f32 0.0, %v576
        %v578 = vpop.f32.mrb[0].mxu0
        %579 = vmatprep.mubr.bf16.mxu0 0
        %580 = vmatmul.mubr.bf16.gmra.mrb[0].mxu0 %v515
        %v581 = vpop.f32.mrb[0].mxu0
        %v582 = vadd.f32 0.0, %v581
        %v583 = vpop.f32.mrb[0].mxu0
        %v584 = vpop.f32.mrb[0].mxu0
        %v585 = vadd.f32 0.0, %v584
        %v586 = vpop.f32.mrb[0].mxu0
        %587 = vdwg.mxu0
        %v596 = vunpack.c.l.b16 %v458
        %v597 = vunpack.c.l.b16 %v459
        %v598 = vunpack.c.l.b16 %v460
        %v599 = vunpack.c.l.b16 %v461
        %v600 = vunpack.c.l.b16 %v462
        %v601 = vunpack.c.l.b16 %v463
        %v602 = vunpack.c.l.b16 %v464
        %v603 = vunpack.c.l.b16 %v465
        %v604 = vpack.c.b16 %v597, %v596
        %v605 = vpack.c.b16 %v599, %v598
        %v606 = vpack.c.b16 %v601, %v600
        %v607 = vpack.c.b16 %v603, %v602
        %v612 = vunpack.c.l.b16 %v434
        %v613 = vunpack.c.l.b16 %v435
        %v614 = vunpack.c.l.b16 %v436
        %v615 = vunpack.c.l.b16 %v437
        %v616 = vpack.c.b16 %v613, %v612
        %v617 = vpack.c.b16 %v615, %v614
        %v619 = vsel %vm504, %v604, 0
        %v622 = vsel %vm504, %v605, 0
        %v625 = vsel %vm504, %v606, 0
        %v628 = vsel %vm504, %v607, 0
        %v631 = vsel %vm504, %v616, 0
        %v634 = vsel %vm504, %v617, 0
        %636 = vmatprep.subr.bf16.mxu0 0
        %637 = vmatpush1.bf16.xpose.msra.mxu0 %v631
        %638 = vmatprep.subr.bf16.mxu0 0
        %639 = vmatpush1.bf16.xpose.msra.mxu0 %v634
        %640 = vmatprep.subr.bf16.mxu0 0
        %641 = vmatpush1.bf16.xpose.msra.mxu0 0
        %642 = vmatprep.subr.bf16.mxu0 0
        %643 = vmatpush1.bf16.xpose.msra.mxu0 0
        %644 = vmatprep.subr.bf16.mxu0 0
        %645 = vmatpush1.bf16.xpose.msra.mxu0 0
        %646 = vmatprep.subr.bf16.mxu0 0
        %647 = vmatpush1.bf16.xpose.msra.mxu0 0
        %648 = vmatprep.subr.bf16.mxu0 0
        %649 = vmatpush1.bf16.xpose.msra.mxu0 0
        %650 = vmatprep.subr.bf16.mxu0 0
        %651 = vmatpush1.bf16.xpose.msra.mxu0 0
        %652 = vmatprep.subr.bf16.mxu0 0
        %653 = vmatpush1.bf16.xpose.msra.mxu0 0
        %654 = vmatprep.subr.bf16.mxu0 0
        %655 = vmatpush1.bf16.xpose.msra.mxu0 0
        %656 = vmatprep.subr.bf16.mxu0 0
        %657 = vmatpush1.bf16.xpose.msra.mxu0 0
        %658 = vmatprep.subr.bf16.mxu0 0
        %659 = vmatpush1.bf16.xpose.msra.mxu0 0
        %660 = vmatprep.subr.bf16.mxu0 0
        %661 = vmatpush1.bf16.xpose.msra.mxu0 0
        %662 = vmatprep.subr.bf16.mxu0 0
        %663 = vmatpush1.bf16.xpose.msra.mxu0 0
        %664 = vmatprep.subr.bf16.mxu0 0
        %665 = vmatpush1.bf16.xpose.msra.mxu0 0
        %666 = vmatprep.subr.bf16.mxu0 0
        %667 = vmatpush1.bf16.xpose.msra.mxu0 0
        %668 = vmatprep.mubr.bf16.mxu0 0
        %669 = vmatmul.mubr.bf16.gmra.mrb[0].mxu0 %v619
        %v670 = vpop.f32.mrb[0].mxu0
        %v671 = vadd.f32 0.0, %v670
        %v672 = vpop.f32.mrb[0].mxu0
        %v673 = vpop.f32.mrb[0].mxu0
        %v674 = vadd.f32 0.0, %v673
        %v675 = vpop.f32.mrb[0].mxu0
        %676 = vmatprep.mubr.bf16.mxu0 0
        %677 = vmatmul.mubr.bf16.gmra.mrb[0].mxu0 %v622
        %v678 = vpop.f32.mrb[0].mxu0
        %v679 = vadd.f32 0.0, %v678
        %v680 = vpop.f32.mrb[0].mxu0
        %v681 = vpop.f32.mrb[0].mxu0
        %v682 = vadd.f32 0.0, %v681
        %v683 = vpop.f32.mrb[0].mxu0
        %684 = vmatprep.mubr.bf16.mxu0 0
        %685 = vmatmul.mubr.bf16.gmra.mrb[0].mxu0 %v625
        %v686 = vpop.f32.mrb[0].mxu0
        %v687 = vadd.f32 0.0, %v686
        %v688 = vpop.f32.mrb[0].mxu0
        %v689 = vpop.f32.mrb[0].mxu0
        %v690 = vadd.f32 0.0, %v689
        %v691 = vpop.f32.mrb[0].mxu0
        %692 = vmatprep.mubr.bf16.mxu0 0
        %693 = vmatmul.mubr.bf16.gmra.mrb[0].mxu0 %v628
        %v694 = vpop.f32.mrb[0].mxu0
        %v695 = vadd.f32 0.0, %v694
        %v696 = vpop.f32.mrb[0].mxu0
        %v697 = vpop.f32.mrb[0].mxu0
        %v698 = vadd.f32 0.0, %v697
        %v699 = vpop.f32.mrb[0].mxu0
        %700 = vdwg.mxu0
        %v709 = vunpack.c.l.b16 %v466
        %v710 = vunpack.c.l.b16 %v467
        %v711 = vunpack.c.l.b16 %v468
        %v712 = vunpack.c.l.b16 %v469
        %v713 = vunpack.c.l.b16 %v470
        %v714 = vunpack.c.l.b16 %v471
        %v715 = vunpack.c.l.b16 %v472
        %v716 = vunpack.c.l.b16 %v473
        %v717 = vpack.c.b16 %v710, %v709
        %v718 = vpack.c.b16 %v712, %v711
        %v719 = vpack.c.b16 %v714, %v713
        %v720 = vpack.c.b16 %v716, %v715
        %v725 = vunpack.c.l.b16 %v440
        %v726 = vunpack.c.l.b16 %v441
        %v727 = vunpack.c.l.b16 %v442
        %v728 = vunpack.c.l.b16 %v443
        %v729 = vpack.c.b16 %v726, %v725
        %v730 = vpack.c.b16 %v728, %v727
        %v732 = vsel %vm504, %v717, 0
        %v735 = vsel %vm504, %v718, 0
        %v738 = vsel %vm504, %v719, 0
        %v741 = vsel %vm504, %v720, 0
        %v744 = vsel %vm504, %v729, 0
        %v747 = vsel %vm504, %v730, 0
        %749 = vmatprep.subr.bf16.mxu0 0
        %750 = vmatpush1.bf16.xpose.msra.mxu0 %v744
        %751 = vmatprep.subr.bf16.mxu0 0
        %752 = vmatpush1.bf16.xpose.msra.mxu0 %v747
        %753 = vmatprep.subr.bf16.mxu0 0
        %754 = vmatpush1.bf16.xpose.msra.mxu0 0
        %755 = vmatprep.subr.bf16.mxu0 0
        %756 = vmatpush1.bf16.xpose.msra.mxu0 0
        %757 = vmatprep.subr.bf16.mxu0 0
        %758 = vmatpush1.bf16.xpose.msra.mxu0 0
        %759 = vmatprep.subr.bf16.mxu0 0
        %760 = vmatpush1.bf16.xpose.msra.mxu0 0
        %761 = vmatprep.subr.bf16.mxu0 0
        %762 = vmatpush1.bf16.xpose.msra.mxu0 0
        %763 = vmatprep.subr.bf16.mxu0 0
        %764 = vmatpush1.bf16.xpose.msra.mxu0 0
        %765 = vmatprep.subr.bf16.mxu0 0
        %766 = vmatpush1.bf16.xpose.msra.mxu0 0
        %767 = vmatprep.subr.bf16.mxu0 0
        %768 = vmatpush1.bf16.xpose.msra.mxu0 0
        %769 = vmatprep.subr.bf16.mxu0 0
        %770 = vmatpush1.bf16.xpose.msra.mxu0 0
        %771 = vmatprep.subr.bf16.mxu0 0
        %772 = vmatpush1.bf16.xpose.msra.mxu0 0
        %773 = vmatprep.subr.bf16.mxu0 0
        %774 = vmatpush1.bf16.xpose.msra.mxu0 0
        %775 = vmatprep.subr.bf16.mxu0 0
        %776 = vmatpush1.bf16.xpose.msra.mxu0 0
        %777 = vmatprep.subr.bf16.mxu0 0
        %778 = vmatpush1.bf16.xpose.msra.mxu0 0
        %779 = vmatprep.subr.bf16.mxu0 0
        %780 = vmatpush1.bf16.xpose.msra.mxu0 0
        %781 = vmatprep.mubr.bf16.mxu0 0
        %782 = vmatmul.mubr.bf16.gmra.mrb[0].mxu0 %v732
        %v783 = vpop.f32.mrb[0].mxu0
        %v784 = vadd.f32 0.0, %v783
        %v785 = vpop.f32.mrb[0].mxu0
        %v786 = vpop.f32.mrb[0].mxu0
        %v787 = vadd.f32 0.0, %v786
        %v788 = vpop.f32.mrb[0].mxu0
        %789 = vmatprep.mubr.bf16.mxu0 0
        %790 = vmatmul.mubr.bf16.gmra.mrb[0].mxu0 %v735
        %v791 = vpop.f32.mrb[0].mxu0
        %v792 = vadd.f32 0.0, %v791
        %v793 = vpop.f32.mrb[0].mxu0
        %v794 = vpop.f32.mrb[0].mxu0
        %v795 = vadd.f32 0.0, %v794
        %v796 = vpop.f32.mrb[0].mxu0
        %797 = vmatprep.mubr.bf16.mxu0 0
        %798 = vmatmul.mubr.bf16.gmra.mrb[0].mxu0 %v738
        %v799 = vpop.f32.mrb[0].mxu0
        %v800 = vadd.f32 0.0, %v799
        %v801 = vpop.f32.mrb[0].mxu0
        %v802 = vpop.f32.mrb[0].mxu0
        %v803 = vadd.f32 0.0, %v802
        %v804 = vpop.f32.mrb[0].mxu0
        %805 = vmatprep.mubr.bf16.mxu0 0
        %806 = vmatmul.mubr.bf16.gmra.mrb[0].mxu0 %v741
        %v807 = vpop.f32.mrb[0].mxu0
        %v808 = vadd.f32 0.0, %v807
        %v809 = vpop.f32.mrb[0].mxu0
        %v810 = vpop.f32.mrb[0].mxu0
        %v811 = vadd.f32 0.0, %v810
        %v812 = vpop.f32.mrb[0].mxu0
        %813 = vdwg.mxu0
        %v814 = vmul.f32 %v558, 0.17677669
        %v815 = vmul.f32 %v561, 0.17677669
        %v816 = vmul.f32 %v566, 0.17677669
        %v817 = vmul.f32 %v569, 0.17677669
        %v818 = vmul.f32 %v574, 0.17677669
        %v819 = vmul.f32 %v577, 0.17677669
        %v820 = vmul.f32 %v582, 0.17677669
        %v821 = vmul.f32 %v585, 0.17677669
        %v822 = vpack.c.bf16 %v815, %v814
        %v823 = vpack.c.bf16 %v817, %v816
        %v824 = vpack.c.bf16 %v819, %v818
        %v825 = vpack.c.bf16 %v821, %v820
        %v826 = vpack.c.bf16 %v674, %v671
        %v827 = vpack.c.bf16 %v682, %v679
        %v828 = vpack.c.bf16 %v690, %v687
        %v829 = vpack.c.bf16 %v698, %v695
        %v830 = vpack.c.bf16 %v787, %v784
        %v831 = vpack.c.bf16 %v795, %v792
        %v832 = vpack.c.bf16 %v803, %v800
        %v833 = vpack.c.bf16 %v811, %v808
        %vm834 = vcmask 64512
        %v836 = vsel %vm834, %v822, 0
        %v839 = vsel %vm834, %v823, 0
        %v842 = vsel %vm834, %v824, 0
        %v845 = vsel %vm834, %v825, 0
        %v848 = vsel %vm834, %v826, 0
        %v851 = vsel %vm834, %v827, 0
        %v854 = vsel %vm834, %v828, 0
        %v857 = vsel %vm834, %v829, 0
        %859 = vmatprep.subr.bf16.mxu0 0
        %860 = vmatpush1.bf16.xpose.msra.mxu0 %v848
        %861 = vmatprep.subr.bf16.mxu0 0
        %862 = vmatpush1.bf16.xpose.msra.mxu0 %v851
        %863 = vmatprep.subr.bf16.mxu0 0
        %864 = vmatpush1.bf16.xpose.msra.mxu0 %v854
        %865 = vmatprep.subr.bf16.mxu0 0
        %866 = vmatpush1.bf16.xpose.msra.mxu0 %v857
        %867 = vmatprep.subr.bf16.mxu0 0
        %868 = vmatpush1.bf16.xpose.msra.mxu0 0
        %869 = vmatprep.subr.bf16.mxu0 0
        %870 = vmatpush1.bf16.xpose.msra.mxu0 0
        %871 = vmatprep.subr.bf16.mxu0 0
        %872 = vmatpush1.bf16.xpose.msra.mxu0 0
        %873 = vmatprep.subr.bf16.mxu0 0
        %874 = vmatpush1.bf16.xpose.msra.mxu0 0
        %875 = vmatprep.subr.bf16.mxu0 0
        %876 = vmatpush1.bf16.xpose.msra.mxu0 0
        %877 = vmatprep.subr.bf16.mxu0 0
        %878 = vmatpush1.bf16.xpose.msra.mxu0 0
        %879 = vmatprep.subr.bf16.mxu0 0
        %880 = vmatpush1.bf16.xpose.msra.mxu0 0
        %881 = vmatprep.subr.bf16.mxu0 0
        %882 = vmatpush1.bf16.xpose.msra.mxu0 0
        %883 = vmatprep.subr.bf16.mxu0 0
        %884 = vmatpush1.bf16.xpose.msra.mxu0 0
        %885 = vmatprep.subr.bf16.mxu0 0
        %886 = vmatpush1.bf16.xpose.msra.mxu0 0
        %887 = vmatprep.subr.bf16.mxu0 0
        %888 = vmatpush1.bf16.xpose.msra.mxu0 0
        %889 = vmatprep.subr.bf16.mxu0 0
        %890 = vmatpush1.bf16.xpose.msra.mxu0 0
        %891 = vmatprep.mubr.bf16.mxu0 0
        %892 = vmatmul.mubr.bf16.gmra.mrb[0].mxu0 %v836
        %v893 = vpop.f32.mrb[0].mxu0
        %v894 = vadd.f32 0.0, %v893
        %v895 = vpop.f32.mrb[0].mxu0
        %v896 = vpop.f32.mrb[0].mxu0
        %v897 = vadd.f32 0.0, %v896
        %v898 = vpop.f32.mrb[0].mxu0
        %899 = vmatprep.mubr.bf16.mxu0 0
        %900 = vmatmul.mubr.bf16.gmra.mrb[0].mxu0 %v839
        %v901 = vpop.f32.mrb[0].mxu0
        %v902 = vadd.f32 0.0, %v901
        %v903 = vpop.f32.mrb[0].mxu0
        %v904 = vpop.f32.mrb[0].mxu0
        %v905 = vadd.f32 0.0, %v904
        %v906 = vpop.f32.mrb[0].mxu0
        %907 = vmatprep.mubr.bf16.mxu0 0
        %908 = vmatmul.mubr.bf16.gmra.mrb[0].mxu0 %v842
        %v909 = vpop.f32.mrb[0].mxu0
        %v910 = vadd.f32 0.0, %v909
        %v911 = vpop.f32.mrb[0].mxu0
        %v912 = vpop.f32.mrb[0].mxu0
        %v913 = vadd.f32 0.0, %v912
        %v914 = vpop.f32.mrb[0].mxu0
        %915 = vmatprep.mubr.bf16.mxu0 0
        %916 = vmatmul.mubr.bf16.gmra.mrb[0].mxu0 %v845
        %v917 = vpop.f32.mrb[0].mxu0
        %v918 = vadd.f32 0.0, %v917
        %v919 = vpop.f32.mrb[0].mxu0
        %v920 = vpop.f32.mrb[0].mxu0
        %v921 = vadd.f32 0.0, %v920
        %v922 = vpop.f32.mrb[0].mxu0
        %923 = vdwg.mxu0
        %vm924 = vcmask 523264
        %v925 = vsel %vm924, %v894, -inf
        %926 = vmax.xlane.f32.xlu0 %v925
        %v927 = vpop.xlane.xlu0 %926
        %v928 = vsel %vm924, %v897, -inf
        %929 = vmax.xlane.f32.xlu0 %v928
        %v930 = vpop.xlane.xlu0 %929
        %v931 = vsel %vm924, %v902, -inf
        %932 = vmax.xlane.f32.xlu0 %v931
        %v933 = vpop.xlane.xlu0 %932
        %v934 = vsel %vm924, %v905, -inf
        %935 = vmax.xlane.f32.xlu0 %v934
        %v936 = vpop.xlane.xlu0 %935
        %v937 = vsel %vm924, %v910, -inf
        %938 = vmax.xlane.f32.xlu0 %v937
        %v939 = vpop.xlane.xlu0 %938
        %v940 = vsel %vm924, %v913, -inf
        %941 = vmax.xlane.f32.xlu0 %v940
        %v942 = vpop.xlane.xlu0 %941
        %v943 = vsel %vm924, %v918, -inf
        %944 = vmax.xlane.f32.xlu0 %v943
        %v945 = vpop.xlane.xlu0 %944
        %v946 = vsel %vm924, %v921, -inf
        %947 = vmax.xlane.f32.xlu0 %v946
        %v948 = vpop.xlane.xlu0 %947
        %v949 = vsub.f32 %v894, %v927
        %v950 = vsub.f32 %v897, %v930
        %v951 = vsub.f32 %v902, %v933
        %v952 = vsub.f32 %v905, %v936
        %v953 = vsub.f32 %v910, %v939
        %v954 = vsub.f32 %v913, %v942
        %v955 = vsub.f32 %v918, %v945
        %v956 = vsub.f32 %v921, %v948
        %v957 = vmul.f32 %v949, 1.442695
        %v958 = vpow.pop %v957
        %v959 = vmul.f32 %v950, 1.442695
        %v960 = vpow.pop %v959
        %v961 = vmul.f32 %v951, 1.442695
        %v962 = vpow.pop %v961
        %v963 = vmul.f32 %v952, 1.442695
        %v964 = vpow.pop %v963
        %v965 = vmul.f32 %v953, 1.442695
        %v966 = vpow.pop %v965
        %v967 = vmul.f32 %v954, 1.442695
        %v968 = vpow.pop %v967
        %v969 = vmul.f32 %v955, 1.442695
        %v970 = vpow.pop %v969
        %v971 = vmul.f32 %v956, 1.442695
        %v972 = vpow.pop %v971
        %v973 = vsel %vm924, %v958, 0.0
        %974 = vadd.xlane.f32.xlu0 %v973
        %v975 = vpop.xlane.xlu0 %974
        %v976 = vsel %vm924, %v960, 0.0
        %977 = vadd.xlane.f32.xlu0 %v976
        %v978 = vpop.xlane.xlu0 %977
        %v979 = vsel %vm924, %v962, 0.0
        %980 = vadd.xlane.f32.xlu0 %v979
        %v981 = vpop.xlane.xlu0 %980
        %v982 = vsel %vm924, %v964, 0.0
        %983 = vadd.xlane.f32.xlu0 %v982
        %v984 = vpop.xlane.xlu0 %983
        %v985 = vsel %vm924, %v966, 0.0
        %986 = vadd.xlane.f32.xlu0 %v985
        %v987 = vpop.xlane.xlu0 %986
        %v988 = vsel %vm924, %v968, 0.0
        %989 = vadd.xlane.f32.xlu0 %v988
        %v990 = vpop.xlane.xlu0 %989
        %v991 = vsel %vm924, %v970, 0.0
        %992 = vadd.xlane.f32.xlu0 %v991
        %v993 = vpop.xlane.xlu0 %992
        %v994 = vsel %vm924, %v972, 0.0
        %995 = vadd.xlane.f32.xlu0 %v994
        %v996 = vpop.xlane.xlu0 %995
        %v997 = vrcp.pop %v975
        %v998 = vrcp.pop %v978
        %v999 = vrcp.pop %v981
        %v1000 = vrcp.pop %v984
        %v1001 = vrcp.pop %v987
        %v1002 = vrcp.pop %v990
        %v1003 = vrcp.pop %v993
        %v1004 = vrcp.pop %v996
        %v1005 = vmul.f32 %v958, %v997
        %v1006 = vmul.f32 %v960, %v998
        %v1007 = vmul.f32 %v962, %v999
        %v1008 = vmul.f32 %v964, %v1000
        %v1009 = vmul.f32 %v966, %v1001
        %v1010 = vmul.f32 %v968, %v1002
        %v1011 = vmul.f32 %v970, %v1003
        %v1012 = vmul.f32 %v972, %v1004
        %1013 = vst.msk [vmem:[%s376] sm:$0xff] %vm924, %v1005
        %1014 = vst.msk [vmem:[%s376 + $0x8] sm:$0xff] %vm924, %v1006
        %1015 = vst.msk [vmem:[%s376 + $0x10] sm:$0xff] %vm924, %v1007
        %1016 = vst.msk [vmem:[%s376 + $0x18] sm:$0xff] %vm924, %v1008
        %1017 = vst.msk [vmem:[%s376 + $0x20] sm:$0xff] %vm924, %v1009
        %1018 = vst.msk [vmem:[%s376 + $0x28] sm:$0xff] %vm924, %v1010
        %1019 = vst.msk [vmem:[%s376 + $0x30] sm:$0xff] %vm924, %v1011
        %1020 = vst.msk [vmem:[%s376 + $0x38] sm:$0xff] %vm924, %v1012
        %v1021 = vpack.c.bf16 %v1006, %v1005
        %v1022 = vpack.c.bf16 %v1008, %v1007
        %v1023 = vpack.c.bf16 %v1010, %v1009
        %v1024 = vpack.c.bf16 %v1012, %v1011
        %v1026 = vsel %vm924, %v1021, 0
        %v1029 = vsel %vm924, %v1022, 0
        %v1032 = vsel %vm924, %v1023, 0
        %v1035 = vsel %vm924, %v1024, 0
        %1037 = vmatprep.subr.bf16.mxu0 0
        %1038 = vmatpush1.bf16.msra.mxu0 %v830
        %1039 = vmatprep.subr.bf16.mxu0 0
        %1040 = vmatpush1.bf16.msra.mxu0 %v831
        %1041 = vmatprep.subr.bf16.mxu0 0
        %1042 = vmatpush1.bf16.msra.mxu0 %v832
        %1043 = vmatprep.subr.bf16.mxu0 0
        %1044 = vmatpush1.bf16.msra.mxu0 %v833
        %1045 = vmatprep.subr.bf16.mxu0 0
        %1046 = vmatpush1.bf16.msra.mxu0 0
        %1047 = vmatprep.subr.bf16.mxu0 0
        %1048 = vmatpush1.bf16.msra.mxu0 0
        %1049 = vmatprep.subr.bf16.mxu0 0
        %1050 = vmatpush1.bf16.msra.mxu0 0
        %1051 = vmatprep.subr.bf16.mxu0 0
        %1052 = vmatpush1.bf16.msra.mxu0 0
        %1053 = vmatprep.subr.bf16.mxu0 0
        %1054 = vmatpush1.bf16.msra.mxu0 0
        %1055 = vmatprep.subr.bf16.mxu0 0
        %1056 = vmatpush1.bf16.msra.mxu0 0
        %1057 = vmatprep.subr.bf16.mxu0 0
        %1058 = vmatpush1.bf16.msra.mxu0 0
        %1059 = vmatprep.subr.bf16.mxu0 0
        %1060 = vmatpush1.bf16.msra.mxu0 0
        %1061 = vmatprep.subr.bf16.mxu0 0
        %1062 = vmatpush1.bf16.msra.mxu0 0
        %1063 = vmatprep.subr.bf16.mxu0 0
        %1064 = vmatpush1.bf16.msra.mxu0 0
        %1065 = vmatprep.subr.bf16.mxu0 0
        %1066 = vmatpush1.bf16.msra.mxu0 0
        %1067 = vmatprep.subr.bf16.mxu0 0
        %1068 = vmatpush1.bf16.msra.mxu0 0
        %1069 = vmatprep.mubr.bf16.mxu0 0
        %1070 = vmatmul.mubr.bf16.gmra.mrb[0].mxu0 %v1026
        %v1071 = vpop.f32.mrb[0].mxu0
        %v1072 = vadd.f32 0.0, %v1071
        %v1073 = vpop.f32.mrb[0].mxu0
        %v1074 = vpop.f32.mrb[0].mxu0
        %v1075 = vadd.f32 0.0, %v1074
        %v1076 = vpop.f32.mrb[0].mxu0
        %1077 = vmatprep.mubr.bf16.mxu0 0
        %1078 = vmatmul.mubr.bf16.gmra.mrb[0].mxu0 %v1029
        %v1079 = vpop.f32.mrb[0].mxu0
        %v1080 = vadd.f32 0.0, %v1079
        %v1081 = vpop.f32.mrb[0].mxu0
        %v1082 = vpop.f32.mrb[0].mxu0
        %v1083 = vadd.f32 0.0, %v1082
        %v1084 = vpop.f32.mrb[0].mxu0
        %1085 = vmatprep.mubr.bf16.mxu0 0
        %1086 = vmatmul.mubr.bf16.gmra.mrb[0].mxu0 %v1032
        %v1087 = vpop.f32.mrb[0].mxu0
        %v1088 = vadd.f32 0.0, %v1087
        %v1089 = vpop.f32.mrb[0].mxu0
        %v1090 = vpop.f32.mrb[0].mxu0
        %v1091 = vadd.f32 0.0, %v1090
        %v1092 = vpop.f32.mrb[0].mxu0
        %1093 = vmatprep.mubr.bf16.mxu0 0
        %1094 = vmatmul.mubr.bf16.gmra.mrb[0].mxu0 %v1035
        %v1095 = vpop.f32.mrb[0].mxu0
        %v1096 = vadd.f32 0.0, %v1095
        %v1097 = vpop.f32.mrb[0].mxu0
        %v1098 = vpop.f32.mrb[0].mxu0
        %v1099 = vadd.f32 0.0, %v1098
        %v1100 = vpop.f32.mrb[0].mxu0
        %1101 = vdwg.mxu0
        %v1102 = vpack.c.bf16 %v1075, %v1072
        %v1103 = vpack.c.bf16 %v1083, %v1080
        %v1104 = vpack.c.bf16 %v1091, %v1088
        %v1105 = vpack.c.bf16 %v1099, %v1096
        %1110 = vrot.lane.b32.xlu0 %v822, 120
        %v1111 = vpop.permute.xlu0 %1110
        %1112 = vrot.lane.b32.xlu0 %v823, 120
        %v1113 = vpop.permute.xlu0 %1112
        %1114 = vrot.lane.b32.xlu0 %v824, 120
        %v1115 = vpop.permute.xlu0 %1114
        %1116 = vrot.lane.b32.xlu0 %v825, 120
        %v1117 = vpop.permute.xlu0 %1116
        %1122 = vrot.lane.b32.xlu0 %v826, 120
        %v1123 = vpop.permute.xlu0 %1122
        %1124 = vrot.lane.b32.xlu0 %v827, 120
        %v1125 = vpop.permute.xlu0 %1124
        %1126 = vrot.lane.b32.xlu0 %v828, 120
        %v1127 = vpop.permute.xlu0 %1126
        %1128 = vrot.lane.b32.xlu0 %v829, 120
        %v1129 = vpop.permute.xlu0 %1128
        %v1131 = vsel %vm834, %v1111, 0
        %v1134 = vsel %vm834, %v1113, 0
        %v1137 = vsel %vm834, %v1115, 0
        %v1140 = vsel %vm834, %v1117, 0
        %v1143 = vsel %vm834, %v1123, 0
        %v1146 = vsel %vm834, %v1125, 0
        %v1149 = vsel %vm834, %v1127, 0
        %v1152 = vsel %vm834, %v1129, 0
        %1154 = vmatprep.subr.bf16.mxu0 0
        %1155 = vmatpush1.bf16.xpose.msra.mxu0 %v1143
        %1156 = vmatprep.subr.bf16.mxu0 0
        %1157 = vmatpush1.bf16.xpose.msra.mxu0 %v1146
        %1158 = vmatprep.subr.bf16.mxu0 0
        %1159 = vmatpush1.bf16.xpose.msra.mxu0 %v1149
        %1160 = vmatprep.subr.bf16.mxu0 0
        %1161 = vmatpush1.bf16.xpose.msra.mxu0 %v1152
        %1162 = vmatprep.subr.bf16.mxu0 0
        %1163 = vmatpush1.bf16.xpose.msra.mxu0 0
        %1164 = vmatprep.subr.bf16.mxu0 0
        %1165 = vmatpush1.bf16.xpose.msra.mxu0 0
        %1166 = vmatprep.subr.bf16.mxu0 0
        %1167 = vmatpush1.bf16.xpose.msra.mxu0 0
        %1168 = vmatprep.subr.bf16.mxu0 0
        %1169 = vmatpush1.bf16.xpose.msra.mxu0 0
        %1170 = vmatprep.subr.bf16.mxu0 0
        %1171 = vmatpush1.bf16.xpose.msra.mxu0 0
        %1172 = vmatprep.subr.bf16.mxu0 0
        %1173 = vmatpush1.bf16.xpose.msra.mxu0 0
        %1174 = vmatprep.subr.bf16.mxu0 0
        %1175 = vmatpush1.bf16.xpose.msra.mxu0 0
        %1176 = vmatprep.subr.bf16.mxu0 0
        %1177 = vmatpush1.bf16.xpose.msra.mxu0 0
        %1178 = vmatprep.subr.bf16.mxu0 0
        %1179 = vmatpush1.bf16.xpose.msra.mxu0 0
        %1180 = vmatprep.subr.bf16.mxu0 0
        %1181 = vmatpush1.bf16.xpose.msra.mxu0 0
        %1182 = vmatprep.subr.bf16.mxu0 0
        %1183 = vmatpush1.bf16.xpose.msra.mxu0 0
        %1184 = vmatprep.subr.bf16.mxu0 0
        %1185 = vmatpush1.bf16.xpose.msra.mxu0 0
        %1186 = vmatprep.mubr.bf16.mxu0 0
        %1187 = vmatmul.mubr.bf16.gmra.mrb[0].mxu0 %v1131
        %v1188 = vpop.f32.mrb[0].mxu0
        %v1189 = vadd.f32 0.0, %v1188
        %v1190 = vpop.f32.mrb[0].mxu0
        %v1191 = vpop.f32.mrb[0].mxu0
        %v1192 = vadd.f32 0.0, %v1191
        %v1193 = vpop.f32.mrb[0].mxu0
        %1194 = vmatprep.mubr.bf16.mxu0 0
        %1195 = vmatmul.mubr.bf16.gmra.mrb[0].mxu0 %v1134
        %v1196 = vpop.f32.mrb[0].mxu0
        %v1197 = vadd.f32 0.0, %v1196
        %v1198 = vpop.f32.mrb[0].mxu0
        %v1199 = vpop.f32.mrb[0].mxu0
        %v1200 = vadd.f32 0.0, %v1199
        %v1201 = vpop.f32.mrb[0].mxu0
        %1202 = vmatprep.mubr.bf16.mxu0 0
        %1203 = vmatmul.mubr.bf16.gmra.mrb[0].mxu0 %v1137
        %v1204 = vpop.f32.mrb[0].mxu0
        %v1205 = vadd.f32 0.0, %v1204
        %v1206 = vpop.f32.mrb[0].mxu0
        %v1207 = vpop.f32.mrb[0].mxu0
        %v1208 = vadd.f32 0.0, %v1207
        %v1209 = vpop.f32.mrb[0].mxu0
        %1210 = vmatprep.mubr.bf16.mxu0 0
        %1211 = vmatmul.mubr.bf16.gmra.mrb[0].mxu0 %v1140
        %v1212 = vpop.f32.mrb[0].mxu0
        %v1213 = vadd.f32 0.0, %v1212
        %v1214 = vpop.f32.mrb[0].mxu0
        %v1215 = vpop.f32.mrb[0].mxu0
        %v1216 = vadd.f32 0.0, %v1215
        %v1217 = vpop.f32.mrb[0].mxu0
        %1218 = vdwg.mxu0
        %v1219 = vsel %vm924, %v1189, -inf
        %1220 = vmax.xlane.f32.xlu0 %v1219
        %v1221 = vpop.xlane.xlu0 %1220
        %v1222 = vsel %vm924, %v1192, -inf
        %1223 = vmax.xlane.f32.xlu0 %v1222
        %v1224 = vpop.xlane.xlu0 %1223
        %v1225 = vsel %vm924, %v1197, -inf
        %1226 = vmax.xlane.f32.xlu0 %v1225
        %v1227 = vpop.xlane.xlu0 %1226
        %v1228 = vsel %vm924, %v1200, -inf
        %1229 = vmax.xlane.f32.xlu0 %v1228
        %v1230 = vpop.xlane.xlu0 %1229
        %v1231 = vsel %vm924, %v1205, -inf
        %1232 = vmax.xlane.f32.xlu0 %v1231
        %v1233 = vpop.xlane.xlu0 %1232
        %v1234 = vsel %vm924, %v1208, -inf
        %1235 = vmax.xlane.f32.xlu0 %v1234
        %v1236 = vpop.xlane.xlu0 %1235
        %v1237 = vsel %vm924, %v1213, -inf
        %1238 = vmax.xlane.f32.xlu0 %v1237
        %v1239 = vpop.xlane.xlu0 %1238
        %v1240 = vsel %vm924, %v1216, -inf
        %1241 = vmax.xlane.f32.xlu0 %v1240
        %v1242 = vpop.xlane.xlu0 %1241
        %v1243 = vsub.f32 %v1189, %v1221
        %v1244 = vsub.f32 %v1192, %v1224
        %v1245 = vsub.f32 %v1197, %v1227
        %v1246 = vsub.f32 %v1200, %v1230
        %v1247 = vsub.f32 %v1205, %v1233
        %v1248 = vsub.f32 %v1208, %v1236
        %v1249 = vsub.f32 %v1213, %v1239
        %v1250 = vsub.f32 %v1216, %v1242
        %v1251 = vmul.f32 %v1243, 1.442695
        %v1252 = vpow.pop %v1251
        %v1253 = vmul.f32 %v1244, 1.442695
        %v1254 = vpow.pop %v1253
        %v1255 = vmul.f32 %v1245, 1.442695
        %v1256 = vpow.pop %v1255
        %v1257 = vmul.f32 %v1246, 1.442695
        %v1258 = vpow.pop %v1257
        %v1259 = vmul.f32 %v1247, 1.442695
        %v1260 = vpow.pop %v1259
        %v1261 = vmul.f32 %v1248, 1.442695
        %v1262 = vpow.pop %v1261
        %v1263 = vmul.f32 %v1249, 1.442695
        %v1264 = vpow.pop %v1263
        %v1265 = vmul.f32 %v1250, 1.442695
        %v1266 = vpow.pop %v1265
        %v1267 = vsel %vm924, %v1252, 0.0
        %1268 = vadd.xlane.f32.xlu0 %v1267
        %v1269 = vpop.xlane.xlu0 %1268
        %v1270 = vsel %vm924, %v1254, 0.0
        %1271 = vadd.xlane.f32.xlu0 %v1270
        %v1272 = vpop.xlane.xlu0 %1271
        %v1273 = vsel %vm924, %v1256, 0.0
        %1274 = vadd.xlane.f32.xlu0 %v1273
        %v1275 = vpop.xlane.xlu0 %1274
        %v1276 = vsel %vm924, %v1258, 0.0
        %1277 = vadd.xlane.f32.xlu0 %v1276
        %v1278 = vpop.xlane.xlu0 %1277
        %v1279 = vsel %vm924, %v1260, 0.0
        %1280 = vadd.xlane.f32.xlu0 %v1279
        %v1281 = vpop.xlane.xlu0 %1280
        %v1282 = vsel %vm924, %v1262, 0.0
        %1283 = vadd.xlane.f32.xlu0 %v1282
        %v1284 = vpop.xlane.xlu0 %1283
        %v1285 = vsel %vm924, %v1264, 0.0
        %1286 = vadd.xlane.f32.xlu0 %v1285
        %v1287 = vpop.xlane.xlu0 %1286
        %v1288 = vsel %vm924, %v1266, 0.0
        %1289 = vadd.xlane.f32.xlu0 %v1288
        %v1290 = vpop.xlane.xlu0 %1289
        %v1291 = vrcp.pop %v1269
        %v1292 = vrcp.pop %v1272
        %v1293 = vrcp.pop %v1275
        %v1294 = vrcp.pop %v1278
        %v1295 = vrcp.pop %v1281
        %v1296 = vrcp.pop %v1284
        %v1297 = vrcp.pop %v1287
        %v1298 = vrcp.pop %v1290
        %v1299 = vmul.f32 %v1252, %v1291
        %v1300 = vmul.f32 %v1254, %v1292
        %v1301 = vmul.f32 %v1256, %v1293
        %v1302 = vmul.f32 %v1258, %v1294
        %v1303 = vmul.f32 %v1260, %v1295
        %v1304 = vmul.f32 %v1262, %v1296
        %v1305 = vmul.f32 %v1264, %v1297
        %v1306 = vmul.f32 %v1266, %v1298
        %s1307 = scalar_lea.vmem %s376, 64 [#allocation2]
        %1308 = vst.msk [vmem:[%s1307] sm:$0xff] %vm924, %v1299
        %1309 = vst.msk [vmem:[%s1307 + $0x8] sm:$0xff] %vm924, %v1300
        %1310 = vst.msk [vmem:[%s1307 + $0x10] sm:$0xff] %vm924, %v1301
        %1311 = vst.msk [vmem:[%s1307 + $0x18] sm:$0xff] %vm924, %v1302
        %1312 = vst.msk [vmem:[%s1307 + $0x20] sm:$0xff] %vm924, %v1303
        %1313 = vst.msk [vmem:[%s1307 + $0x28] sm:$0xff] %vm924, %v1304
        %1314 = vst.msk [vmem:[%s1307 + $0x30] sm:$0xff] %vm924, %v1305
        %1315 = vst.msk [vmem:[%s1307 + $0x38] sm:$0xff] %vm924, %v1306
        %v1316 = vpack.c.bf16 %v1300, %v1299
        %v1317 = vpack.c.bf16 %v1302, %v1301
        %v1318 = vpack.c.bf16 %v1304, %v1303
        %v1319 = vpack.c.bf16 %v1306, %v1305
        %1324 = vrot.lane.b32.xlu0 %v830, 120
        %v1325 = vpop.permute.xlu0 %1324
        %1326 = vrot.lane.b32.xlu0 %v831, 120
        %v1327 = vpop.permute.xlu0 %1326
        %1328 = vrot.lane.b32.xlu0 %v832, 120
        %v1329 = vpop.permute.xlu0 %1328
        %1330 = vrot.lane.b32.xlu0 %v833, 120
        %v1331 = vpop.permute.xlu0 %1330
        %v1337 = vsel %vm924, %v1316, 0
        %v1340 = vsel %vm924, %v1317, 0
        %v1343 = vsel %vm924, %v1318, 0
        %v1346 = vsel %vm924, %v1319, 0
        %1348 = vmatprep.subr.bf16.mxu0 0
        %1349 = vmatpush1.bf16.msra.mxu0 %v1325
        %1350 = vmatprep.subr.bf16.mxu0 0
        %1351 = vmatpush1.bf16.msra.mxu0 %v1327
        %1352 = vmatprep.subr.bf16.mxu0 0
        %1353 = vmatpush1.bf16.msra.mxu0 %v1329
        %1354 = vmatprep.subr.bf16.mxu0 0
        %1355 = vmatpush1.bf16.msra.mxu0 %v1331
        %1356 = vmatprep.subr.bf16.mxu0 0
        %1357 = vmatpush1.bf16.msra.mxu0 0
        %1358 = vmatprep.subr.bf16.mxu0 0
        %1359 = vmatpush1.bf16.msra.mxu0 0
        %1360 = vmatprep.subr.bf16.mxu0 0
        %1361 = vmatpush1.bf16.msra.mxu0 0
        %1362 = vmatprep.subr.bf16.mxu0 0
        %1363 = vmatpush1.bf16.msra.mxu0 0
        %1364 = vmatprep.subr.bf16.mxu0 0
        %1365 = vmatpush1.bf16.msra.mxu0 0
        %1366 = vmatprep.subr.bf16.mxu0 0
        %1367 = vmatpush1.bf16.msra.mxu0 0
        %1368 = vmatprep.subr.bf16.mxu0 0
        %1369 = vmatpush1.bf16.msra.mxu0 0
        %1370 = vmatprep.subr.bf16.mxu0 0
        %1371 = vmatpush1.bf16.msra.mxu0 0
        %1372 = vmatprep.subr.bf16.mxu0 0
        %1373 = vmatpush1.bf16.msra.mxu0 0
        %1374 = vmatprep.subr.bf16.mxu0 0
        %1375 = vmatpush1.bf16.msra.mxu0 0
        %1376 = vmatprep.subr.bf16.mxu0 0
        %1377 = vmatpush1.bf16.msra.mxu0 0
        %1378 = vmatprep.subr.bf16.mxu0 0
        %1379 = vmatpush1.bf16.msra.mxu0 0
        %1380 = vmatprep.mubr.bf16.mxu0 0
        %1381 = vmatmul.mubr.bf16.gmra.mrb[0].mxu0 %v1337
        %v1382 = vpop.f32.mrb[0].mxu0
        %v1383 = vadd.f32 0.0, %v1382
        %v1384 = vpop.f32.mrb[0].mxu0
        %v1385 = vpop.f32.mrb[0].mxu0
        %v1386 = vadd.f32 0.0, %v1385
        %v1387 = vpop.f32.mrb[0].mxu0
        %1388 = vmatprep.mubr.bf16.mxu0 0
        %1389 = vmatmul.mubr.bf16.gmra.mrb[0].mxu0 %v1340
        %v1390 = vpop.f32.mrb[0].mxu0
        %v1391 = vadd.f32 0.0, %v1390
        %v1392 = vpop.f32.mrb[0].mxu0
        %v1393 = vpop.f32.mrb[0].mxu0
        %v1394 = vadd.f32 0.0, %v1393
        %v1395 = vpop.f32.mrb[0].mxu0
        %1396 = vmatprep.mubr.bf16.mxu0 0
        %1397 = vmatmul.mubr.bf16.gmra.mrb[0].mxu0 %v1343
        %v1398 = vpop.f32.mrb[0].mxu0
        %v1399 = vadd.f32 0.0, %v1398
        %v1400 = vpop.f32.mrb[0].mxu0
        %v1401 = vpop.f32.mrb[0].mxu0
        %v1402 = vadd.f32 0.0, %v1401
        %v1403 = vpop.f32.mrb[0].mxu0
        %1404 = vmatprep.mubr.bf16.mxu0 0
        %1405 = vmatmul.mubr.bf16.gmra.mrb[0].mxu0 %v1346
        %v1406 = vpop.f32.mrb[0].mxu0
        %v1407 = vadd.f32 0.0, %v1406
        %v1408 = vpop.f32.mrb[0].mxu0
        %v1409 = vpop.f32.mrb[0].mxu0
        %v1410 = vadd.f32 0.0, %v1409
        %v1411 = vpop.f32.mrb[0].mxu0
        %1412 = vdwg.mxu0
        %v1413 = vpack.c.bf16 %v1386, %v1383
        %v1414 = vpack.c.bf16 %v1394, %v1391
        %v1415 = vpack.c.bf16 %v1402, %v1399
        %v1416 = vpack.c.bf16 %v1410, %v1407
        %v1418 = vsel %vm834, %v1413, 0
        %v1421 = vsel %vm834, %v1414, 0
        %v1424 = vsel %vm834, %v1415, 0
        %v1427 = vsel %vm834, %v1416, 0
        %vm1429 = vcmask 1043456
        %v1431 = vsel %vm1429, %v447, 0
        %1433 = vmatprep.subr.bf16.mxu0 0
        %1434 = vmatpush1.bf16.msra.mxu0 %v1431
        %1435 = vmatprep.subr.bf16.mxu0 0
        %1436 = vmatpush1.bf16.msra.mxu0 0
        %1437 = vmatprep.subr.bf16.mxu0 0
        %1438 = vmatpush1.bf16.msra.mxu0 0
        %1439 = vmatprep.subr.bf16.mxu0 0
        %1440 = vmatpush1.bf16.msra.mxu0 0
        %1441 = vmatprep.subr.bf16.mxu0 0
        %1442 = vmatpush1.bf16.msra.mxu0 0
        %1443 = vmatprep.subr.bf16.mxu0 0
        %1444 = vmatpush1.bf16.msra.mxu0 0
        %1445 = vmatprep.subr.bf16.mxu0 0
        %1446 = vmatpush1.bf16.msra.mxu0 0
        %1447 = vmatprep.subr.bf16.mxu0 0
        %1448 = vmatpush1.bf16.msra.mxu0 0
        %1449 = vmatprep.subr.bf16.mxu0 0
        %1450 = vmatpush1.bf16.msra.mxu0 0
        %1451 = vmatprep.subr.bf16.mxu0 0
        %1452 = vmatpush1.bf16.msra.mxu0 0
        %1453 = vmatprep.subr.bf16.mxu0 0
        %1454 = vmatpush1.bf16.msra.mxu0 0
        %1455 = vmatprep.subr.bf16.mxu0 0
        %1456 = vmatpush1.bf16.msra.mxu0 0
        %1457 = vmatprep.subr.bf16.mxu0 0
        %1458 = vmatpush1.bf16.msra.mxu0 0
        %1459 = vmatprep.subr.bf16.mxu0 0
        %1460 = vmatpush1.bf16.msra.mxu0 0
        %1461 = vmatprep.subr.bf16.mxu0 0
        %1462 = vmatpush1.bf16.msra.mxu0 0
        %1463 = vmatprep.subr.bf16.mxu0 0
        %1464 = vmatpush1.bf16.msra.mxu0 0
        %1465 = vmatprep.mubr.bf16.mxu0 0
        %1466 = vmatmul.mubr.bf16.gmra.mrb[0].mxu0 %v1418
        %v1467 = vpop.f32.mrb[0].mxu0
        %v1468 = vadd.f32 0.0, %v1467
        %v1469 = vpop.f32.mrb[0].mxu0
        %v1470 = vpop.f32.mrb[0].mxu0
        %v1471 = vadd.f32 0.0, %v1470
        %v1472 = vpop.f32.mrb[0].mxu0
        %1473 = vmatprep.mubr.bf16.mxu0 0
        %1474 = vmatmul.mubr.bf16.gmra.mrb[0].mxu0 %v1421
        %v1475 = vpop.f32.mrb[0].mxu0
        %v1476 = vadd.f32 0.0, %v1475
        %v1477 = vpop.f32.mrb[0].mxu0
        %v1478 = vpop.f32.mrb[0].mxu0
        %v1479 = vadd.f32 0.0, %v1478
        %v1480 = vpop.f32.mrb[0].mxu0
        %1481 = vmatprep.mubr.bf16.mxu0 0
        %1482 = vmatmul.mubr.bf16.gmra.mrb[0].mxu0 %v1424
        %v1483 = vpop.f32.mrb[0].mxu0
        %v1484 = vadd.f32 0.0, %v1483
        %v1485 = vpop.f32.mrb[0].mxu0
        %v1486 = vpop.f32.mrb[0].mxu0
        %v1487 = vadd.f32 0.0, %v1486
        %v1488 = vpop.f32.mrb[0].mxu0
        %1489 = vmatprep.mubr.bf16.mxu0 0
        %1490 = vmatmul.mubr.bf16.gmra.mrb[0].mxu0 %v1427
        %v1491 = vpop.f32.mrb[0].mxu0
        %v1492 = vadd.f32 0.0, %v1491
        %v1493 = vpop.f32.mrb[0].mxu0
        %v1494 = vpop.f32.mrb[0].mxu0
        %v1495 = vadd.f32 0.0, %v1494
        %v1496 = vpop.f32.mrb[0].mxu0
        %1497 = vdwg.mxu0
        %v1499 = vsel %vm834, %v1102, 0
        %v1502 = vsel %vm834, %v1103, 0
        %v1505 = vsel %vm834, %v1104, 0
        %v1508 = vsel %vm834, %v1105, 0
        %v1511 = vsel %vm1429, %v446, 0
        %1513 = vmatprep.subr.bf16.mxu0 0
        %1514 = vmatpush1.bf16.msra.mxu0 %v1511
        %1515 = vmatprep.subr.bf16.mxu0 0
        %1516 = vmatpush1.bf16.msra.mxu0 0
        %1517 = vmatprep.subr.bf16.mxu0 0
        %1518 = vmatpush1.bf16.msra.mxu0 0
        %1519 = vmatprep.subr.bf16.mxu0 0
        %1520 = vmatpush1.bf16.msra.mxu0 0
        %1521 = vmatprep.subr.bf16.mxu0 0
        %1522 = vmatpush1.bf16.msra.mxu0 0
        %1523 = vmatprep.subr.bf16.mxu0 0
        %1524 = vmatpush1.bf16.msra.mxu0 0
        %1525 = vmatprep.subr.bf16.mxu0 0
        %1526 = vmatpush1.bf16.msra.mxu0 0
        %1527 = vmatprep.subr.bf16.mxu0 0
        %1528 = vmatpush1.bf16.msra.mxu0 0
        %1529 = vmatprep.subr.bf16.mxu0 0
        %1530 = vmatpush1.bf16.msra.mxu0 0
        %1531 = vmatprep.subr.bf16.mxu0 0
        %1532 = vmatpush1.bf16.msra.mxu0 0
        %1533 = vmatprep.subr.bf16.mxu0 0
        %1534 = vmatpush1.bf16.msra.mxu0 0
        %1535 = vmatprep.subr.bf16.mxu0 0
        %1536 = vmatpush1.bf16.msra.mxu0 0
        %1537 = vmatprep.subr.bf16.mxu0 0
        %1538 = vmatpush1.bf16.msra.mxu0 0
        %1539 = vmatprep.subr.bf16.mxu0 0
        %1540 = vmatpush1.bf16.msra.mxu0 0
        %1541 = vmatprep.subr.bf16.mxu0 0
        %1542 = vmatpush1.bf16.msra.mxu0 0
        %1543 = vmatprep.subr.bf16.mxu0 0
        %1544 = vmatpush1.bf16.msra.mxu0 0
        %1545 = vmatprep.mubr.bf16.mxu0 0
        %1546 = vmatmul.mubr.bf16.gmra.mrb[0].mxu0 %v1499
        %v1547 = vpop.f32.mrb[0].mxu0
        %v1548 = vadd.f32 %v1468, %v1547
        %v1549 = vpop.f32.mrb[0].mxu0
        %v1550 = vpop.f32.mrb[0].mxu0
        %v1551 = vadd.f32 %v1471, %v1550
        %v1552 = vpop.f32.mrb[0].mxu0
        %1553 = vmatprep.mubr.bf16.mxu0 0
        %1554 = vmatmul.mubr.bf16.gmra.mrb[0].mxu0 %v1502
        %v1555 = vpop.f32.mrb[0].mxu0
        %v1556 = vadd.f32 %v1476, %v1555
        %v1557 = vpop.f32.mrb[0].mxu0
        %v1558 = vpop.f32.mrb[0].mxu0
        %v1559 = vadd.f32 %v1479, %v1558
        %v1560 = vpop.f32.mrb[0].mxu0
        %1561 = vmatprep.mubr.bf16.mxu0 0
        %1562 = vmatmul.mubr.bf16.gmra.mrb[0].mxu0 %v1505
        %v1563 = vpop.f32.mrb[0].mxu0
        %v1564 = vadd.f32 %v1484, %v1563
        %v1565 = vpop.f32.mrb[0].mxu0
        %v1566 = vpop.f32.mrb[0].mxu0
        %v1567 = vadd.f32 %v1487, %v1566
        %v1568 = vpop.f32.mrb[0].mxu0
        %1569 = vmatprep.mubr.bf16.mxu0 0
        %1570 = vmatmul.mubr.bf16.gmra.mrb[0].mxu0 %v1508
        %v1571 = vpop.f32.mrb[0].mxu0
        %v1572 = vadd.f32 %v1492, %v1571
        %v1573 = vpop.f32.mrb[0].mxu0
        %v1574 = vpop.f32.mrb[0].mxu0
        %v1575 = vadd.f32 %v1495, %v1574
        %v1576 = vpop.f32.mrb[0].mxu0
        %1577 = vdwg.mxu0
        %1578 = vrot.lane.b32.xlu0 %v822, 112
        %v1579 = vpop.permute.xlu0 %1578
        %1580 = vrot.lane.b32.xlu0 %v823, 112
        %v1581 = vpop.permute.xlu0 %1580
        %1582 = vrot.lane.b32.xlu0 %v824, 112
        %v1583 = vpop.permute.xlu0 %1582
        %1584 = vrot.lane.b32.xlu0 %v825, 112
        %v1585 = vpop.permute.xlu0 %1584
        %1586 = vrot.lane.b32.xlu0 %v826, 112
        %v1587 = vpop.permute.xlu0 %1586
        %1588 = vrot.lane.b32.xlu0 %v827, 112
        %v1589 = vpop.permute.xlu0 %1588
        %1590 = vrot.lane.b32.xlu0 %v828, 112
        %v1591 = vpop.permute.xlu0 %1590
        %1592 = vrot.lane.b32.xlu0 %v829, 112
        %v1593 = vpop.permute.xlu0 %1592
        %v1595 = vsel %vm834, %v1579, 0
        %v1598 = vsel %vm834, %v1581, 0
        %v1601 = vsel %vm834, %v1583, 0
        %v1604 = vsel %vm834, %v1585, 0
        %v1607 = vsel %vm834, %v1587, 0
        %v1610 = vsel %vm834, %v1589, 0
        %v1613 = vsel %vm834, %v1591, 0
        %v1616 = vsel %vm834, %v1593, 0
        %1618 = vmatprep.subr.bf16.mxu0 0
        %1619 = vmatpush1.bf16.xpose.msra.mxu0 %v1607
        %1620 = vmatprep.subr.bf16.mxu0 0
        %1621 = vmatpush1.bf16.xpose.msra.mxu0 %v1610
        %1622 = vmatprep.subr.bf16.mxu0 0
        %1623 = vmatpush1.bf16.xpose.msra.mxu0 %v1613
        %1624 = vmatprep.subr.bf16.mxu0 0
        %1625 = vmatpush1.bf16.xpose.msra.mxu0 %v1616
        %1626 = vmatprep.subr.bf16.mxu0 0
        %1627 = vmatpush1.bf16.xpose.msra.mxu0 0
        %1628 = vmatprep.subr.bf16.mxu0 0
        %1629 = vmatpush1.bf16.xpose.msra.mxu0 0
        %1630 = vmatprep.subr.bf16.mxu0 0
        %1631 = vmatpush1.bf16.xpose.msra.mxu0 0
        %1632 = vmatprep.subr.bf16.mxu0 0
        %1633 = vmatpush1.bf16.xpose.msra.mxu0 0
        %1634 = vmatprep.subr.bf16.mxu0 0
        %1635 = vmatpush1.bf16.xpose.msra.mxu0 0
        %1636 = vmatprep.subr.bf16.mxu0 0
        %1637 = vmatpush1.bf16.xpose.msra.mxu0 0
        %1638 = vmatprep.subr.bf16.mxu0 0
        %1639 = vmatpush1.bf16.xpose.msra.mxu0 0
        %1640 = vmatprep.subr.bf16.mxu0 0
        %1641 = vmatpush1.bf16.xpose.msra.mxu0 0
        %1642 = vmatprep.subr.bf16.mxu0 0
        %1643 = vmatpush1.bf16.xpose.msra.mxu0 0
        %1644 = vmatprep.subr.bf16.mxu0 0
        %1645 = vmatpush1.bf16.xpose.msra.mxu0 0
        %1646 = vmatprep.subr.bf16.mxu0 0
        %1647 = vmatpush1.bf16.xpose.msra.mxu0 0
        %1648 = vmatprep.subr.bf16.mxu0 0
        %1649 = vmatpush1.bf16.xpose.msra.mxu0 0
        %1650 = vmatprep.mubr.bf16.mxu0 0
        %1651 = vmatmul.mubr.bf16.gmra.mrb[0].mxu0 %v1595
        %v1652 = vpop.f32.mrb[0].mxu0
        %v1653 = vadd.f32 0.0, %v1652
        %v1654 = vpop.f32.mrb[0].mxu0
        %v1655 = vpop.f32.mrb[0].mxu0
        %v1656 = vadd.f32 0.0, %v1655
        %v1657 = vpop.f32.mrb[0].mxu0
        %1658 = vmatprep.mubr.bf16.mxu0 0
        %1659 = vmatmul.mubr.bf16.gmra.mrb[0].mxu0 %v1598
        %v1660 = vpop.f32.mrb[0].mxu0
        %v1661 = vadd.f32 0.0, %v1660
        %v1662 = vpop.f32.mrb[0].mxu0
        %v1663 = vpop.f32.mrb[0].mxu0
        %v1664 = vadd.f32 0.0, %v1663
        %v1665 = vpop.f32.mrb[0].mxu0
        %1666 = vmatprep.mubr.bf16.mxu0 0
        %1667 = vmatmul.mubr.bf16.gmra.mrb[0].mxu0 %v1601
        %v1668 = vpop.f32.mrb[0].mxu0
        %v1669 = vadd.f32 0.0, %v1668
        %v1670 = vpop.f32.mrb[0].mxu0
        %v1671 = vpop.f32.mrb[0].mxu0
        %v1672 = vadd.f32 0.0, %v1671
        %v1673 = vpop.f32.mrb[0].mxu0
        %1674 = vmatprep.mubr.bf16.mxu0 0
        %1675 = vmatmul.mubr.bf16.gmra.mrb[0].mxu0 %v1604
        %v1676 = vpop.f32.mrb[0].mxu0
        %v1677 = vadd.f32 0.0, %v1676
        %v1678 = vpop.f32.mrb[0].mxu0
        %v1679 = vpop.f32.mrb[0].mxu0
        %v1680 = vadd.f32 0.0, %v1679
        %v1681 = vpop.f32.mrb[0].mxu0
        %1682 = vdwg.mxu0
        %v1683 = vsel %vm924, %v1653, -inf
        %1684 = vmax.xlane.f32.xlu0 %v1683
        %v1685 = vpop.xlane.xlu0 %1684
        %v1686 = vsel %vm924, %v1656, -inf
        %1687 = vmax.xlane.f32.xlu0 %v1686
        %v1688 = vpop.xlane.xlu0 %1687
        %v1689 = vsel %vm924, %v1661, -inf
        %1690 = vmax.xlane.f32.xlu0 %v1689
        %v1691 = vpop.xlane.xlu0 %1690
        %v1692 = vsel %vm924, %v1664, -inf
        %1693 = vmax.xlane.f32.xlu0 %v1692
        %v1694 = vpop.xlane.xlu0 %1693
        %v1695 = vsel %vm924, %v1669, -inf
        %1696 = vmax.xlane.f32.xlu0 %v1695
        %v1697 = vpop.xlane.xlu0 %1696
        %v1698 = vsel %vm924, %v1672, -inf
        %1699 = vmax.xlane.f32.xlu0 %v1698
        %v1700 = vpop.xlane.xlu0 %1699
        %v1701 = vsel %vm924, %v1677, -inf
        %1702 = vmax.xlane.f32.xlu0 %v1701
        %v1703 = vpop.xlane.xlu0 %1702
        %v1704 = vsel %vm924, %v1680, -inf
        %1705 = vmax.xlane.f32.xlu0 %v1704
        %v1706 = vpop.xlane.xlu0 %1705
        %v1707 = vsub.f32 %v1653, %v1685
        %v1708 = vsub.f32 %v1656, %v1688
        %v1709 = vsub.f32 %v1661, %v1691
        %v1710 = vsub.f32 %v1664, %v1694
        %v1711 = vsub.f32 %v1669, %v1697
        %v1712 = vsub.f32 %v1672, %v1700
        %v1713 = vsub.f32 %v1677, %v1703
        %v1714 = vsub.f32 %v1680, %v1706
        %v1715 = vmul.f32 %v1707, 1.442695
        %v1716 = vpow.pop %v1715
        %v1717 = vmul.f32 %v1708, 1.442695
        %v1718 = vpow.pop %v1717
        %v1719 = vmul.f32 %v1709, 1.442695
        %v1720 = vpow.pop %v1719
        %v1721 = vmul.f32 %v1710, 1.442695
        %v1722 = vpow.pop %v1721
        %v1723 = vmul.f32 %v1711, 1.442695
        %v1724 = vpow.pop %v1723
        %v1725 = vmul.f32 %v1712, 1.442695
        %v1726 = vpow.pop %v1725
        %v1727 = vmul.f32 %v1713, 1.442695
        %v1728 = vpow.pop %v1727
        %v1729 = vmul.f32 %v1714, 1.442695
        %v1730 = vpow.pop %v1729
        %v1731 = vsel %vm924, %v1716, 0.0
        %1732 = vadd.xlane.f32.xlu0 %v1731
        %v1733 = vpop.xlane.xlu0 %1732
        %v1734 = vsel %vm924, %v1718, 0.0
        %1735 = vadd.xlane.f32.xlu0 %v1734
        %v1736 = vpop.xlane.xlu0 %1735
        %v1737 = vsel %vm924, %v1720, 0.0
        %1738 = vadd.xlane.f32.xlu0 %v1737
        %v1739 = vpop.xlane.xlu0 %1738
        %v1740 = vsel %vm924, %v1722, 0.0
        %1741 = vadd.xlane.f32.xlu0 %v1740
        %v1742 = vpop.xlane.xlu0 %1741
        %v1743 = vsel %vm924, %v1724, 0.0
        %1744 = vadd.xlane.f32.xlu0 %v1743
        %v1745 = vpop.xlane.xlu0 %1744
        %v1746 = vsel %vm924, %v1726, 0.0
        %1747 = vadd.xlane.f32.xlu0 %v1746
        %v1748 = vpop.xlane.xlu0 %1747
        %v1749 = vsel %vm924, %v1728, 0.0
        %1750 = vadd.xlane.f32.xlu0 %v1749
        %v1751 = vpop.xlane.xlu0 %1750
        %v1752 = vsel %vm924, %v1730, 0.0
        %1753 = vadd.xlane.f32.xlu0 %v1752
        %v1754 = vpop.xlane.xlu0 %1753
        %v1755 = vrcp.pop %v1733
        %v1756 = vrcp.pop %v1736
        %v1757 = vrcp.pop %v1739
        %v1758 = vrcp.pop %v1742
        %v1759 = vrcp.pop %v1745
        %v1760 = vrcp.pop %v1748
        %v1761 = vrcp.pop %v1751
        %v1762 = vrcp.pop %v1754
        %v1763 = vmul.f32 %v1716, %v1755
        %v1764 = vmul.f32 %v1718, %v1756
        %v1765 = vmul.f32 %v1720, %v1757
        %v1766 = vmul.f32 %v1722, %v1758
        %v1767 = vmul.f32 %v1724, %v1759
        %v1768 = vmul.f32 %v1726, %v1760
        %v1769 = vmul.f32 %v1728, %v1761
        %v1770 = vmul.f32 %v1730, %v1762
        %s1771 = scalar_lea.vmem %s376, 128 [#allocation2]
        %1772 = vst.msk [vmem:[%s1771] sm:$0xff] %vm924, %v1763
        %1773 = vst.msk [vmem:[%s1771 + $0x8] sm:$0xff] %vm924, %v1764
        %1774 = vst.msk [vmem:[%s1771 + $0x10] sm:$0xff] %vm924, %v1765
        %1775 = vst.msk [vmem:[%s1771 + $0x18] sm:$0xff] %vm924, %v1766
        %1776 = vst.msk [vmem:[%s1771 + $0x20] sm:$0xff] %vm924, %v1767
        %1777 = vst.msk [vmem:[%s1771 + $0x28] sm:$0xff] %vm924, %v1768
        %1778 = vst.msk [vmem:[%s1771 + $0x30] sm:$0xff] %vm924, %v1769
        %1779 = vst.msk [vmem:[%s1771 + $0x38] sm:$0xff] %vm924, %v1770
        %v1780 = vpack.c.bf16 %v1764, %v1763
        %v1781 = vpack.c.bf16 %v1766, %v1765
        %v1782 = vpack.c.bf16 %v1768, %v1767
        %v1783 = vpack.c.bf16 %v1770, %v1769
        %1784 = vrot.lane.b32.xlu0 %v830, 112
        %v1785 = vpop.permute.xlu0 %1784
        %1786 = vrot.lane.b32.xlu0 %v831, 112
        %v1787 = vpop.permute.xlu0 %1786
        %1788 = vrot.lane.b32.xlu0 %v832, 112
        %v1789 = vpop.permute.xlu0 %1788
        %1790 = vrot.lane.b32.xlu0 %v833, 112
        %v1791 = vpop.permute.xlu0 %1790
        %v1797 = vsel %vm924, %v1780, 0
        %v1800 = vsel %vm924, %v1781, 0
        %v1803 = vsel %vm924, %v1782, 0
        %v1806 = vsel %vm924, %v1783, 0
        %1808 = vmatprep.subr.bf16.mxu0 0
        %1809 = vmatpush1.bf16.msra.mxu0 %v1785
        %1810 = vmatprep.subr.bf16.mxu0 0
        %1811 = vmatpush1.bf16.msra.mxu0 %v1787
        %1812 = vmatprep.subr.bf16.mxu0 0
        %1813 = vmatpush1.bf16.msra.mxu0 %v1789
        %1814 = vmatprep.subr.bf16.mxu0 0
        %1815 = vmatpush1.bf16.msra.mxu0 %v1791
        %1816 = vmatprep.subr.bf16.mxu0 0
        %1817 = vmatpush1.bf16.msra.mxu0 0
        %1818 = vmatprep.subr.bf16.mxu0 0
        %1819 = vmatpush1.bf16.msra.mxu0 0
        %1820 = vmatprep.subr.bf16.mxu0 0
        %1821 = vmatpush1.bf16.msra.mxu0 0
        %1822 = vmatprep.subr.bf16.mxu0 0
        %1823 = vmatpush1.bf16.msra.mxu0 0
        %1824 = vmatprep.subr.bf16.mxu0 0
        %1825 = vmatpush1.bf16.msra.mxu0 0
        %1826 = vmatprep.subr.bf16.mxu0 0
        %1827 = vmatpush1.bf16.msra.mxu0 0
        %1828 = vmatprep.subr.bf16.mxu0 0
        %1829 = vmatpush1.bf16.msra.mxu0 0
        %1830 = vmatprep.subr.bf16.mxu0 0
        %1831 = vmatpush1.bf16.msra.mxu0 0
        %1832 = vmatprep.subr.bf16.mxu0 0
        %1833 = vmatpush1.bf16.msra.mxu0 0
        %1834 = vmatprep.subr.bf16.mxu0 0
        %1835 = vmatpush1.bf16.msra.mxu0 0
        %1836 = vmatprep.subr.bf16.mxu0 0
        %1837 = vmatpush1.bf16.msra.mxu0 0
        %1838 = vmatprep.subr.bf16.mxu0 0
        %1839 = vmatpush1.bf16.msra.mxu0 0
        %1840 = vmatprep.mubr.bf16.mxu0 0
        %1841 = vmatmul.mubr.bf16.gmra.mrb[0].mxu0 %v1797
        %v1842 = vpop.f32.mrb[0].mxu0
        %v1843 = vadd.f32 0.0, %v1842
        %v1844 = vpop.f32.mrb[0].mxu0
        %v1845 = vpop.f32.mrb[0].mxu0
        %v1846 = vadd.f32 0.0, %v1845
        %v1847 = vpop.f32.mrb[0].mxu0
        %1848 = vmatprep.mubr.bf16.mxu0 0
        %1849 = vmatmul.mubr.bf16.gmra.mrb[0].mxu0 %v1800
        %v1850 = vpop.f32.mrb[0].mxu0
        %v1851 = vadd.f32 0.0, %v1850
        %v1852 = vpop.f32.mrb[0].mxu0
        %v1853 = vpop.f32.mrb[0].mxu0
        %v1854 = vadd.f32 0.0, %v1853
        %v1855 = vpop.f32.mrb[0].mxu0
        %1856 = vmatprep.mubr.bf16.mxu0 0
        %1857 = vmatmul.mubr.bf16.gmra.mrb[0].mxu0 %v1803
        %v1858 = vpop.f32.mrb[0].mxu0
        %v1859 = vadd.f32 0.0, %v1858
        %v1860 = vpop.f32.mrb[0].mxu0
        %v1861 = vpop.f32.mrb[0].mxu0
        %v1862 = vadd.f32 0.0, %v1861
        %v1863 = vpop.f32.mrb[0].mxu0
        %1864 = vmatprep.mubr.bf16.mxu0 0
        %1865 = vmatmul.mubr.bf16.gmra.mrb[0].mxu0 %v1806
        %v1866 = vpop.f32.mrb[0].mxu0
        %v1867 = vadd.f32 0.0, %v1866
        %v1868 = vpop.f32.mrb[0].mxu0
        %v1869 = vpop.f32.mrb[0].mxu0
        %v1870 = vadd.f32 0.0, %v1869
        %v1871 = vpop.f32.mrb[0].mxu0
        %1872 = vdwg.mxu0
        %v1873 = vpack.c.bf16 %v1846, %v1843
        %v1874 = vpack.c.bf16 %v1854, %v1851
        %v1875 = vpack.c.bf16 %v1862, %v1859
        %v1876 = vpack.c.bf16 %v1870, %v1867
        %v1878 = vsel %vm834, %v1873, 0
        %v1881 = vsel %vm834, %v1874, 0
        %v1884 = vsel %vm834, %v1875, 0
        %v1887 = vsel %vm834, %v1876, 0
        %v1890 = vsel %vm1429, %v448, 0
        %1892 = vmatprep.subr.bf16.mxu0 0
        %1893 = vmatpush1.bf16.msra.mxu0 %v1890
        %1894 = vmatprep.subr.bf16.mxu0 0
        %1895 = vmatpush1.bf16.msra.mxu0 0
        %1896 = vmatprep.subr.bf16.mxu0 0
        %1897 = vmatpush1.bf16.msra.mxu0 0
        %1898 = vmatprep.subr.bf16.mxu0 0
        %1899 = vmatpush1.bf16.msra.mxu0 0
        %1900 = vmatprep.subr.bf16.mxu0 0
        %1901 = vmatpush1.bf16.msra.mxu0 0
        %1902 = vmatprep.subr.bf16.mxu0 0
        %1903 = vmatpush1.bf16.msra.mxu0 0
        %1904 = vmatprep.subr.bf16.mxu0 0
        %1905 = vmatpush1.bf16.msra.mxu0 0
        %1906 = vmatprep.subr.bf16.mxu0 0
        %1907 = vmatpush1.bf16.msra.mxu0 0
        %1908 = vmatprep.subr.bf16.mxu0 0
        %1909 = vmatpush1.bf16.msra.mxu0 0
        %1910 = vmatprep.subr.bf16.mxu0 0
        %1911 = vmatpush1.bf16.msra.mxu0 0
        %1912 = vmatprep.subr.bf16.mxu0 0
        %1913 = vmatpush1.bf16.msra.mxu0 0
        %1914 = vmatprep.subr.bf16.mxu0 0
        %1915 = vmatpush1.bf16.msra.mxu0 0
        %1916 = vmatprep.subr.bf16.mxu0 0
        %1917 = vmatpush1.bf16.msra.mxu0 0
        %1918 = vmatprep.subr.bf16.mxu0 0
        %1919 = vmatpush1.bf16.msra.mxu0 0
        %1920 = vmatprep.subr.bf16.mxu0 0
        %1921 = vmatpush1.bf16.msra.mxu0 0
        %1922 = vmatprep.subr.bf16.mxu0 0
        %1923 = vmatpush1.bf16.msra.mxu0 0
        %1924 = vmatprep.mubr.bf16.mxu0 0
        %1925 = vmatmul.mubr.bf16.gmra.mrb[0].mxu0 %v1878
        %v1926 = vpop.f32.mrb[0].mxu0
        %v1927 = vadd.f32 0.0, %v1926
        %v1928 = vpop.f32.mrb[0].mxu0
        %v1929 = vpop.f32.mrb[0].mxu0
        %v1930 = vadd.f32 0.0, %v1929
        %v1931 = vpop.f32.mrb[0].mxu0
        %1932 = vmatprep.mubr.bf16.mxu0 0
        %1933 = vmatmul.mubr.bf16.gmra.mrb[0].mxu0 %v1881
        %v1934 = vpop.f32.mrb[0].mxu0
        %v1935 = vadd.f32 0.0, %v1934
        %v1936 = vpop.f32.mrb[0].mxu0
        %v1937 = vpop.f32.mrb[0].mxu0
        %v1938 = vadd.f32 0.0, %v1937
        %v1939 = vpop.f32.mrb[0].mxu0
        %1940 = vmatprep.mubr.bf16.mxu0 0
        %1941 = vmatmul.mubr.bf16.gmra.mrb[0].mxu0 %v1884
        %v1942 = vpop.f32.mrb[0].mxu0
        %v1943 = vadd.f32 0.0, %v1942
        %v1944 = vpop.f32.mrb[0].mxu0
        %v1945 = vpop.f32.mrb[0].mxu0
        %v1946 = vadd.f32 0.0, %v1945
        %v1947 = vpop.f32.mrb[0].mxu0
        %1948 = vmatprep.mubr.bf16.mxu0 0
        %1949 = vmatmul.mubr.bf16.gmra.mrb[0].mxu0 %v1887
        %v1950 = vpop.f32.mrb[0].mxu0
        %v1951 = vadd.f32 0.0, %v1950
        %v1952 = vpop.f32.mrb[0].mxu0
        %v1953 = vpop.f32.mrb[0].mxu0
        %v1954 = vadd.f32 0.0, %v1953
        %v1955 = vpop.f32.mrb[0].mxu0
        %1956 = vdwg.mxu0
        %v1957 = vadd.f32 %v1548, %v1927
        %v1958 = vadd.f32 %v1551, %v1930
        %v1959 = vadd.f32 %v1556, %v1935
        %v1960 = vadd.f32 %v1559, %v1938
        %v1961 = vadd.f32 %v1564, %v1943
        %v1962 = vadd.f32 %v1567, %v1946
        %v1963 = vadd.f32 %v1572, %v1951
        %v1964 = vadd.f32 %v1575, %v1954
        %1965 = vrot.lane.b32.xlu0 %v822, 104
        %v1966 = vpop.permute.xlu0 %1965
        %1967 = vrot.lane.b32.xlu0 %v823, 104
        %v1968 = vpop.permute.xlu0 %1967
        %1969 = vrot.lane.b32.xlu0 %v824, 104
        %v1970 = vpop.permute.xlu0 %1969
        %1971 = vrot.lane.b32.xlu0 %v825, 104
        %v1972 = vpop.permute.xlu0 %1971
        %1973 = vrot.lane.b32.xlu0 %v826, 104
        %v1974 = vpop.permute.xlu0 %1973
        %1975 = vrot.lane.b32.xlu0 %v827, 104
        %v1976 = vpop.permute.xlu0 %1975
        %1977 = vrot.lane.b32.xlu0 %v828, 104
        %v1978 = vpop.permute.xlu0 %1977
        %1979 = vrot.lane.b32.xlu0 %v829, 104
        %v1980 = vpop.permute.xlu0 %1979
        %v1982 = vsel %vm834, %v1966, 0
        %v1985 = vsel %vm834, %v1968, 0
        %v1988 = vsel %vm834, %v1970, 0
        %v1991 = vsel %vm834, %v1972, 0
        %v1994 = vsel %vm834, %v1974, 0
        %v1997 = vsel %vm834, %v1976, 0
        %v2000 = vsel %vm834, %v1978, 0
        %v2003 = vsel %vm834, %v1980, 0
        %2005 = vmatprep.subr.bf16.mxu0 0
        %2006 = vmatpush1.bf16.xpose.msra.mxu0 %v1994
        %2007 = vmatprep.subr.bf16.mxu0 0
        %2008 = vmatpush1.bf16.xpose.msra.mxu0 %v1997
        %2009 = vmatprep.subr.bf16.mxu0 0
        %2010 = vmatpush1.bf16.xpose.msra.mxu0 %v2000
        %2011 = vmatprep.subr.bf16.mxu0 0
        %2012 = vmatpush1.bf16.xpose.msra.mxu0 %v2003
        %2013 = vmatprep.subr.bf16.mxu0 0
        %2014 = vmatpush1.bf16.xpose.msra.mxu0 0
        %2015 = vmatprep.subr.bf16.mxu0 0
        %2016 = vmatpush1.bf16.xpose.msra.mxu0 0
        %2017 = vmatprep.subr.bf16.mxu0 0
        %2018 = vmatpush1.bf16.xpose.msra.mxu0 0
        %2019 = vmatprep.subr.bf16.mxu0 0
        %2020 = vmatpush1.bf16.xpose.msra.mxu0 0
        %2021 = vmatprep.subr.bf16.mxu0 0
        %2022 = vmatpush1.bf16.xpose.msra.mxu0 0
        %2023 = vmatprep.subr.bf16.mxu0 0
        %2024 = vmatpush1.bf16.xpose.msra.mxu0 0
        %2025 = vmatprep.subr.bf16.mxu0 0
        %2026 = vmatpush1.bf16.xpose.msra.mxu0 0
        %2027 = vmatprep.subr.bf16.mxu0 0
        %2028 = vmatpush1.bf16.xpose.msra.mxu0 0
        %2029 = vmatprep.subr.bf16.mxu0 0
        %2030 = vmatpush1.bf16.xpose.msra.mxu0 0
        %2031 = vmatprep.subr.bf16.mxu0 0
        %2032 = vmatpush1.bf16.xpose.msra.mxu0 0
        %2033 = vmatprep.subr.bf16.mxu0 0
        %2034 = vmatpush1.bf16.xpose.msra.mxu0 0
        %2035 = vmatprep.subr.bf16.mxu0 0
        %2036 = vmatpush1.bf16.xpose.msra.mxu0 0
        %2037 = vmatprep.mubr.bf16.mxu0 0
        %2038 = vmatmul.mubr.bf16.gmra.mrb[0].mxu0 %v1982
        %v2039 = vpop.f32.mrb[0].mxu0
        %v2040 = vadd.f32 0.0, %v2039
        %v2041 = vpop.f32.mrb[0].mxu0
        %v2042 = vpop.f32.mrb[0].mxu0
        %v2043 = vadd.f32 0.0, %v2042
        %v2044 = vpop.f32.mrb[0].mxu0
        %2045 = vmatprep.mubr.bf16.mxu0 0
        %2046 = vmatmul.mubr.bf16.gmra.mrb[0].mxu0 %v1985
        %v2047 = vpop.f32.mrb[0].mxu0
        %v2048 = vadd.f32 0.0, %v2047
        %v2049 = vpop.f32.mrb[0].mxu0
        %v2050 = vpop.f32.mrb[0].mxu0
        %v2051 = vadd.f32 0.0, %v2050
        %v2052 = vpop.f32.mrb[0].mxu0
        %2053 = vmatprep.mubr.bf16.mxu0 0
        %2054 = vmatmul.mubr.bf16.gmra.mrb[0].mxu0 %v1988
        %v2055 = vpop.f32.mrb[0].mxu0
        %v2056 = vadd.f32 0.0, %v2055
        %v2057 = vpop.f32.mrb[0].mxu0
        %v2058 = vpop.f32.mrb[0].mxu0
        %v2059 = vadd.f32 0.0, %v2058
        %v2060 = vpop.f32.mrb[0].mxu0
        %2061 = vmatprep.mubr.bf16.mxu0 0
        %2062 = vmatmul.mubr.bf16.gmra.mrb[0].mxu0 %v1991
        %v2063 = vpop.f32.mrb[0].mxu0
        %v2064 = vadd.f32 0.0, %v2063
        %v2065 = vpop.f32.mrb[0].mxu0
        %v2066 = vpop.f32.mrb[0].mxu0
        %v2067 = vadd.f32 0.0, %v2066
        %v2068 = vpop.f32.mrb[0].mxu0
        %2069 = vdwg.mxu0
        %v2070 = vsel %vm924, %v2040, -inf
        %2071 = vmax.xlane.f32.xlu0 %v2070
        %v2072 = vpop.xlane.xlu0 %2071
        %v2073 = vsel %vm924, %v2043, -inf
        %2074 = vmax.xlane.f32.xlu0 %v2073
        %v2075 = vpop.xlane.xlu0 %2074
        %v2076 = vsel %vm924, %v2048, -inf
        %2077 = vmax.xlane.f32.xlu0 %v2076
        %v2078 = vpop.xlane.xlu0 %2077
        %v2079 = vsel %vm924, %v2051, -inf
        %2080 = vmax.xlane.f32.xlu0 %v2079
        %v2081 = vpop.xlane.xlu0 %2080
        %v2082 = vsel %vm924, %v2056, -inf
        %2083 = vmax.xlane.f32.xlu0 %v2082
        %v2084 = vpop.xlane.xlu0 %2083
        %v2085 = vsel %vm924, %v2059, -inf
        %2086 = vmax.xlane.f32.xlu0 %v2085
        %v2087 = vpop.xlane.xlu0 %2086
        %v2088 = vsel %vm924, %v2064, -inf
        %2089 = vmax.xlane.f32.xlu0 %v2088
        %v2090 = vpop.xlane.xlu0 %2089
        %v2091 = vsel %vm924, %v2067, -inf
        %2092 = vmax.xlane.f32.xlu0 %v2091
        %v2093 = vpop.xlane.xlu0 %2092
        %v2094 = vsub.f32 %v2040, %v2072
        %v2095 = vsub.f32 %v2043, %v2075
        %v2096 = vsub.f32 %v2048, %v2078
        %v2097 = vsub.f32 %v2051, %v2081
        %v2098 = vsub.f32 %v2056, %v2084
        %v2099 = vsub.f32 %v2059, %v2087
        %v2100 = vsub.f32 %v2064, %v2090
        %v2101 = vsub.f32 %v2067, %v2093
        %v2102 = vmul.f32 %v2094, 1.442695
        %v2103 = vpow.pop %v2102
        %v2104 = vmul.f32 %v2095, 1.442695
        %v2105 = vpow.pop %v2104
        %v2106 = vmul.f32 %v2096, 1.442695
        %v2107 = vpow.pop %v2106
        %v2108 = vmul.f32 %v2097, 1.442695
        %v2109 = vpow.pop %v2108
        %v2110 = vmul.f32 %v2098, 1.442695
        %v2111 = vpow.pop %v2110
        %v2112 = vmul.f32 %v2099, 1.442695
        %v2113 = vpow.pop %v2112
        %v2114 = vmul.f32 %v2100, 1.442695
        %v2115 = vpow.pop %v2114
        %v2116 = vmul.f32 %v2101, 1.442695
        %v2117 = vpow.pop %v2116
        %v2118 = vsel %vm924, %v2103, 0.0
        %2119 = vadd.xlane.f32.xlu0 %v2118
        %v2120 = vpop.xlane.xlu0 %2119
        %v2121 = vsel %vm924, %v2105, 0.0
        %2122 = vadd.xlane.f32.xlu0 %v2121
        %v2123 = vpop.xlane.xlu0 %2122
        %v2124 = vsel %vm924, %v2107, 0.0
        %2125 = vadd.xlane.f32.xlu0 %v2124
        %v2126 = vpop.xlane.xlu0 %2125
        %v2127 = vsel %vm924, %v2109, 0.0
        %2128 = vadd.xlane.f32.xlu0 %v2127
        %v2129 = vpop.xlane.xlu0 %2128
        %v2130 = vsel %vm924, %v2111, 0.0
        %2131 = vadd.xlane.f32.xlu0 %v2130
        %v2132 = vpop.xlane.xlu0 %2131
        %v2133 = vsel %vm924, %v2113, 0.0
        %2134 = vadd.xlane.f32.xlu0 %v2133
        %v2135 = vpop.xlane.xlu0 %2134
        %v2136 = vsel %vm924, %v2115, 0.0
        %2137 = vadd.xlane.f32.xlu0 %v2136
        %v2138 = vpop.xlane.xlu0 %2137
        %v2139 = vsel %vm924, %v2117, 0.0
        %2140 = vadd.xlane.f32.xlu0 %v2139
        %v2141 = vpop.xlane.xlu0 %2140
        %v2142 = vrcp.pop %v2120
        %v2143 = vrcp.pop %v2123
        %v2144 = vrcp.pop %v2126
        %v2145 = vrcp.pop %v2129
        %v2146 = vrcp.pop %v2132
        %v2147 = vrcp.pop %v2135
        %v2148 = vrcp.pop %v2138
        %v2149 = vrcp.pop %v2141
        %v2150 = vmul.f32 %v2103, %v2142
        %v2151 = vmul.f32 %v2105, %v2143
        %v2152 = vmul.f32 %v2107, %v2144
        %v2153 = vmul.f32 %v2109, %v2145
        %v2154 = vmul.f32 %v2111, %v2146
        %v2155 = vmul.f32 %v2113, %v2147
        %v2156 = vmul.f32 %v2115, %v2148
        %v2157 = vmul.f32 %v2117, %v2149
        %s2158 = scalar_lea.vmem %s376, 192 [#allocation2]
        %2159 = vst.msk [vmem:[%s2158] sm:$0xff] %vm924, %v2150
        %2160 = vst.msk [vmem:[%s2158 + $0x8] sm:$0xff] %vm924, %v2151
        %2161 = vst.msk [vmem:[%s2158 + $0x10] sm:$0xff] %vm924, %v2152
        %2162 = vst.msk [vmem:[%s2158 + $0x18] sm:$0xff] %vm924, %v2153
        %2163 = vst.msk [vmem:[%s2158 + $0x20] sm:$0xff] %vm924, %v2154
        %2164 = vst.msk [vmem:[%s2158 + $0x28] sm:$0xff] %vm924, %v2155
        %2165 = vst.msk [vmem:[%s2158 + $0x30] sm:$0xff] %vm924, %v2156
        %2166 = vst.msk [vmem:[%s2158 + $0x38] sm:$0xff] %vm924, %v2157
        %v2167 = vpack.c.bf16 %v2151, %v2150
        %v2168 = vpack.c.bf16 %v2153, %v2152
        %v2169 = vpack.c.bf16 %v2155, %v2154
        %v2170 = vpack.c.bf16 %v2157, %v2156
        %2171 = vrot.lane.b32.xlu0 %v830, 104
        %v2172 = vpop.permute.xlu0 %2171
        %2173 = vrot.lane.b32.xlu0 %v831, 104
        %v2174 = vpop.permute.xlu0 %2173
        %2175 = vrot.lane.b32.xlu0 %v832, 104
        %v2176 = vpop.permute.xlu0 %2175
        %2177 = vrot.lane.b32.xlu0 %v833, 104
        %v2178 = vpop.permute.xlu0 %2177
        %v2184 = vsel %vm924, %v2167, 0
        %v2187 = vsel %vm924, %v2168, 0
        %v2190 = vsel %vm924, %v2169, 0
        %v2193 = vsel %vm924, %v2170, 0
        %2195 = vmatprep.subr.bf16.mxu0 0
        %2196 = vmatpush1.bf16.msra.mxu0 %v2172
        %2197 = vmatprep.subr.bf16.mxu0 0
        %2198 = vmatpush1.bf16.msra.mxu0 %v2174
        %2199 = vmatprep.subr.bf16.mxu0 0
        %2200 = vmatpush1.bf16.msra.mxu0 %v2176
        %2201 = vmatprep.subr.bf16.mxu0 0
        %2202 = vmatpush1.bf16.msra.mxu0 %v2178
        %2203 = vmatprep.subr.bf16.mxu0 0
        %2204 = vmatpush1.bf16.msra.mxu0 0
        %2205 = vmatprep.subr.bf16.mxu0 0
        %2206 = vmatpush1.bf16.msra.mxu0 0
        %2207 = vmatprep.subr.bf16.mxu0 0
        %2208 = vmatpush1.bf16.msra.mxu0 0
        %2209 = vmatprep.subr.bf16.mxu0 0
        %2210 = vmatpush1.bf16.msra.mxu0 0
        %2211 = vmatprep.subr.bf16.mxu0 0
        %2212 = vmatpush1.bf16.msra.mxu0 0
        %2213 = vmatprep.subr.bf16.mxu0 0
        %2214 = vmatpush1.bf16.msra.mxu0 0
        %2215 = vmatprep.subr.bf16.mxu0 0
        %2216 = vmatpush1.bf16.msra.mxu0 0
        %2217 = vmatprep.subr.bf16.mxu0 0
        %2218 = vmatpush1.bf16.msra.mxu0 0
        %2219 = vmatprep.subr.bf16.mxu0 0
        %2220 = vmatpush1.bf16.msra.mxu0 0
        %2221 = vmatprep.subr.bf16.mxu0 0
        %2222 = vmatpush1.bf16.msra.mxu0 0
        %2223 = vmatprep.subr.bf16.mxu0 0
        %2224 = vmatpush1.bf16.msra.mxu0 0
        %2225 = vmatprep.subr.bf16.mxu0 0
        %2226 = vmatpush1.bf16.msra.mxu0 0
        %2227 = vmatprep.mubr.bf16.mxu0 0
        %2228 = vmatmul.mubr.bf16.gmra.mrb[0].mxu0 %v2184
        %v2229 = vpop.f32.mrb[0].mxu0
        %v2230 = vadd.f32 0.0, %v2229
        %v2231 = vpop.f32.mrb[0].mxu0
        %v2232 = vpop.f32.mrb[0].mxu0
        %v2233 = vadd.f32 0.0, %v2232
        %v2234 = vpop.f32.mrb[0].mxu0
        %2235 = vmatprep.mubr.bf16.mxu0 0
        %2236 = vmatmul.mubr.bf16.gmra.mrb[0].mxu0 %v2187
        %v2237 = vpop.f32.mrb[0].mxu0
        %v2238 = vadd.f32 0.0, %v2237
        %v2239 = vpop.f32.mrb[0].mxu0
        %v2240 = vpop.f32.mrb[0].mxu0
        %v2241 = vadd.f32 0.0, %v2240
        %v2242 = vpop.f32.mrb[0].mxu0
        %2243 = vmatprep.mubr.bf16.mxu0 0
        %2244 = vmatmul.mubr.bf16.gmra.mrb[0].mxu0 %v2190
        %v2245 = vpop.f32.mrb[0].mxu0
        %v2246 = vadd.f32 0.0, %v2245
        %v2247 = vpop.f32.mrb[0].mxu0
        %v2248 = vpop.f32.mrb[0].mxu0
        %v2249 = vadd.f32 0.0, %v2248
        %v2250 = vpop.f32.mrb[0].mxu0
        %2251 = vmatprep.mubr.bf16.mxu0 0
        %2252 = vmatmul.mubr.bf16.gmra.mrb[0].mxu0 %v2193
        %v2253 = vpop.f32.mrb[0].mxu0
        %v2254 = vadd.f32 0.0, %v2253
        %v2255 = vpop.f32.mrb[0].mxu0
        %v2256 = vpop.f32.mrb[0].mxu0
        %v2257 = vadd.f32 0.0, %v2256
        %v2258 = vpop.f32.mrb[0].mxu0
        %2259 = vdwg.mxu0
        %v2260 = vpack.c.bf16 %v2233, %v2230
        %v2261 = vpack.c.bf16 %v2241, %v2238
        %v2262 = vpack.c.bf16 %v2249, %v2246
        %v2263 = vpack.c.bf16 %v2257, %v2254
        %v2265 = vsel %vm834, %v2260, 0
        %v2268 = vsel %vm834, %v2261, 0
        %v2271 = vsel %vm834, %v2262, 0
        %v2274 = vsel %vm834, %v2263, 0
        %v2277 = vsel %vm1429, %v449, 0
        %2279 = vmatprep.subr.bf16.mxu0 0
        %2280 = vmatpush1.bf16.msra.mxu0 %v2277
        %2281 = vmatprep.subr.bf16.mxu0 0
        %2282 = vmatpush1.bf16.msra.mxu0 0
        %2283 = vmatprep.subr.bf16.mxu0 0
        %2284 = vmatpush1.bf16.msra.mxu0 0
        %2285 = vmatprep.subr.bf16.mxu0 0
        %2286 = vmatpush1.bf16.msra.mxu0 0
        %2287 = vmatprep.subr.bf16.mxu0 0
        %2288 = vmatpush1.bf16.msra.mxu0 0
        %2289 = vmatprep.subr.bf16.mxu0 0
        %2290 = vmatpush1.bf16.msra.mxu0 0
        %2291 = vmatprep.subr.bf16.mxu0 0
        %2292 = vmatpush1.bf16.msra.mxu0 0
        %2293 = vmatprep.subr.bf16.mxu0 0
        %2294 = vmatpush1.bf16.msra.mxu0 0
        %2295 = vmatprep.subr.bf16.mxu0 0
        %2296 = vmatpush1.bf16.msra.mxu0 0
        %2297 = vmatprep.subr.bf16.mxu0 0
        %2298 = vmatpush1.bf16.msra.mxu0 0
        %2299 = vmatprep.subr.bf16.mxu0 0
        %2300 = vmatpush1.bf16.msra.mxu0 0
        %2301 = vmatprep.subr.bf16.mxu0 0
        %2302 = vmatpush1.bf16.msra.mxu0 0
        %2303 = vmatprep.subr.bf16.mxu0 0
        %2304 = vmatpush1.bf16.msra.mxu0 0
        %2305 = vmatprep.subr.bf16.mxu0 0
        %2306 = vmatpush1.bf16.msra.mxu0 0
        %2307 = vmatprep.subr.bf16.mxu0 0
        %2308 = vmatpush1.bf16.msra.mxu0 0
        %2309 = vmatprep.subr.bf16.mxu0 0
        %2310 = vmatpush1.bf16.msra.mxu0 0
        %2311 = vmatprep.mubr.bf16.mxu0 0
        %2312 = vmatmul.mubr.bf16.gmra.mrb[0].mxu0 %v2265
        %v2313 = vpop.f32.mrb[0].mxu0
        %v2314 = vadd.f32 0.0, %v2313
        %v2315 = vpop.f32.mrb[0].mxu0
        %v2316 = vpop.f32.mrb[0].mxu0
        %v2317 = vadd.f32 0.0, %v2316
        %v2318 = vpop.f32.mrb[0].mxu0
        %2319 = vmatprep.mubr.bf16.mxu0 0
        %2320 = vmatmul.mubr.bf16.gmra.mrb[0].mxu0 %v2268
        %v2321 = vpop.f32.mrb[0].mxu0
        %v2322 = vadd.f32 0.0, %v2321
        %v2323 = vpop.f32.mrb[0].mxu0
        %v2324 = vpop.f32.mrb[0].mxu0
        %v2325 = vadd.f32 0.0, %v2324
        %v2326 = vpop.f32.mrb[0].mxu0
        %2327 = vmatprep.mubr.bf16.mxu0 0
        %2328 = vmatmul.mubr.bf16.gmra.mrb[0].mxu0 %v2271
        %v2329 = vpop.f32.mrb[0].mxu0
        %v2330 = vadd.f32 0.0, %v2329
        %v2331 = vpop.f32.mrb[0].mxu0
        %v2332 = vpop.f32.mrb[0].mxu0
        %v2333 = vadd.f32 0.0, %v2332
        %v2334 = vpop.f32.mrb[0].mxu0
        %2335 = vmatprep.mubr.bf16.mxu0 0
        %2336 = vmatmul.mubr.bf16.gmra.mrb[0].mxu0 %v2274
        %v2337 = vpop.f32.mrb[0].mxu0
        %v2338 = vadd.f32 0.0, %v2337
        %v2339 = vpop.f32.mrb[0].mxu0
        %v2340 = vpop.f32.mrb[0].mxu0
        %v2341 = vadd.f32 0.0, %v2340
        %v2342 = vpop.f32.mrb[0].mxu0
        %2343 = vdwg.mxu0
        %v2344 = vadd.f32 %v1957, %v2314
        %v2345 = vadd.f32 %v1958, %v2317
        %v2346 = vadd.f32 %v1959, %v2322
        %v2347 = vadd.f32 %v1960, %v2325
        %v2348 = vadd.f32 %v1961, %v2330
        %v2349 = vadd.f32 %v1962, %v2333
        %v2350 = vadd.f32 %v1963, %v2338
        %v2351 = vadd.f32 %v1964, %v2341
        %v2352 = vld [vmem:[%s405] sm:$0xff]
        %v2353 = vld [vmem:[%s405 + $0x8] sm:$0xff]
        %v2354 = vld [vmem:[%s405 + $0x10] sm:$0xff]
        %v2355 = vld [vmem:[%s405 + $0x18] sm:$0xff]
        %v2356 = vld [vmem:[%s405 + $0x20] sm:$0xff]
        %v2357 = vld [vmem:[%s405 + $0x28] sm:$0xff]
        %v2358 = vld [vmem:[%s405 + $0x30] sm:$0xff]
        %v2359 = vld [vmem:[%s405 + $0x38] sm:$0xff]
        %v2360 = vadd.f32 %v2352, %v2344
        %v2361 = vadd.f32 %v2353, %v2345
        %v2362 = vadd.f32 %v2354, %v2346
        %v2363 = vadd.f32 %v2355, %v2347
        %v2364 = vadd.f32 %v2356, %v2348
        %v2365 = vadd.f32 %v2357, %v2349
        %v2366 = vadd.f32 %v2358, %v2350
        %v2367 = vadd.f32 %v2359, %v2351
        %2368 = vst.msk [vmem:[%s405] sm:$0xff] %vm504, %v2360
        %2369 = vst.msk [vmem:[%s405 + $0x8] sm:$0xff] %vm504, %v2361
        %2370 = vst.msk [vmem:[%s405 + $0x10] sm:$0xff] %vm504, %v2362
        %2371 = vst.msk [vmem:[%s405 + $0x18] sm:$0xff] %vm504, %v2363
        %2372 = vst.msk [vmem:[%s405 + $0x20] sm:$0xff] %vm504, %v2364
        %2373 = vst.msk [vmem:[%s405 + $0x28] sm:$0xff] %vm504, %v2365
        %2374 = vst.msk [vmem:[%s405 + $0x30] sm:$0xff] %vm504, %v2366
        %2375 = vst.msk [vmem:[%s405 + $0x38] sm:$0xff] %vm504, %v2367
        %s2376 = smul.u32 8, %s29
        %p2377 = scmp.lt.s32.totalorder %s28, 1
        %s2378 = scalar_select %p2377, %s28, 1
        %p2379 = scmp.lt.s32.totalorder %s2376, 7
        %s2380 = scalar_select %p2379, %s2376, 7
        %s2381 = smul.addr %s2378, 8
        %s2382 = sadd.s32 %s2380, %s2381
        %s2383 = smul.addr %s2382, 8
        %s2384 = scalar_lea.vmem %s7, %s2383
        %s2385 = sand.u32 %s246, 1
        %s2386 = scalar_lea.sflag [#allocation3], %s2385
        %s2387 = sand.u32 %s246, 1
        %s2388 = smul.addr %s2387, 256
        %s2389 = scalar_lea.vmem [#allocation2], %s2388
        // Predicated region
        $region53: #{tpu_custom_call.1} parent=47 // pred_check
          %p2390 = pneg %p226
        $region54: #{tpu_custom_call.1} parent=47 // pred_check_branch
          %2392 = sbr.rel (%p2390) target = $region56
        $region55: #{tpu_custom_call.1} parent=47 // pred_region
          %s2393 = smul.u32 8, %s29
        $region56: #{tpu_custom_call.1} parent=47 // pred_fallthru
          _
        // Predicated region
        $region57: #{tpu_custom_call.1} parent=47 // pred_check
          %p2394 = pneg %p256
        $region58: #{tpu_custom_call.1} parent=47 // pred_check_branch
          %2396 = sbr.rel (%p2394) target = $region60
        $region59: #{tpu_custom_call.1} parent=47 // pred_region
          %s2397 = smul.u32 4, %s30
          %s2398 = smul.u32 8, %s29
          %s2400 = ssub.s32 4096, 4096
          %2401 = vsyncadd %s2386, %s2400
          %s2402 = smul.addr %s2397, 8
          %s2403 = sadd.s32 %s2398, %s2402
          %s2404 = smul.addr %s28, 32
          %s2405 = sadd.s32 %s2403, %s2404
          %s2406 = smul.addr %s2405, 128
          %s2407 = scalar_lea.hbm %s8, %s2406
          %s2408 = sshll.u32 %s2389, 4
          %s2409 = int_to_ptr.vmem [resolvable:$true] %s2408
          %2414 = dma.vmem_to_hbm [thread:$0]  %s2409, 4096, %s2407, %s2386, 128, 128, 8
        $region60: #{tpu_custom_call.1} parent=47 // pred_fallthru
          _
      $region48: #{tpu_custom_call.1} parent=5 // pred_fallthru
        _
      %p2415 = scmp.le.s32.totalorder 2, %s18
      // Predicated region
      $region61: #{tpu_custom_call.1} parent=5 // pred_check
        %p2416 = pneg %p2415
      $region62: #{tpu_custom_call.1} parent=5 // pred_check_branch
        %2418 = sbr.rel (%p2416) target = $region64
      $region63: #{tpu_custom_call.1} parent=5 // pred_region
        %s2419 = ssub.s32 %s18, 2
        // Predicated region
        $region65: #{tpu_custom_call.1} parent=63 // pred_check
          %p2420 = pneg %p232
        $region66: #{tpu_custom_call.1} parent=63 // pred_check_branch
          %2422 = sbr.rel (%p2420) target = $region68
        $region67: #{tpu_custom_call.1} parent=63 // pred_region
          %s2423 = smul.u32 8, %s32
          %p2424 = scmp.lt.s32.totalorder %s31, 1
          %s2425 = scalar_select %p2424, %s31, 1
          %p2426 = scmp.lt.s32.totalorder %s2423, 7
          %s2427 = scalar_select %p2426, %s2423, 7
          %s2428 = smul.addr %s2425, 8
          %s2429 = sadd.s32 %s2427, %s2428
          %s2430 = smul.addr %s2429, 8
          %s2431 = scalar_lea.vmem %s7, %s2430
        $region68: #{tpu_custom_call.1} parent=63 // pred_fallthru
          _
        // Predicated region
        $region69: #{tpu_custom_call.1} parent=63 // pred_check
          %p2432 = pneg %p262
        $region70: #{tpu_custom_call.1} parent=63 // pred_check_branch
          %2434 = sbr.rel (%p2432) target = $region72
        $region71: #{tpu_custom_call.1} parent=63 // pred_region
          %s2435 = sand.u32 %s247, 1
          %s2436 = scalar_lea.sflag [#allocation3], %s2435
          %s2437 = sand.u32 %s247, 1
          %s2438 = smul.addr %s2437, 256
          %s2439 = scalar_lea.vmem [#allocation2], %s2438
          %2440 = dma.done %s2436, 4096
        $region72: #{tpu_custom_call.1} parent=63 // pred_fallthru
          _
      $region64: #{tpu_custom_call.1} parent=5 // pred_fallthru
        _
    $region6: #{tpu_custom_call.1} parent=1 // loop_footer
      %s22 = sadd.s32 1, %s18
    $region7: #{tpu_custom_call.1} parent=1 // loop_footer_branch
      %17 = sbr.rel target = $region3
    $region8: #{tpu_custom_call.1} parent=1 // loop_exit
      _
    %2441 = vsyncpa [#allocation3], 1
    %s2442 = scalar_lea.sflag [#allocation3], 1
    %2443 = vsyncpa %s2442, 1

</llo_original>
